<compile_context>
chip_gen: v5e
topology: v5e:2x2
jax: 0.10.0
libtpu: 0.0.40
codegen_flags: <defaults>
</compile_context>

<pallas_src>
import functools

import numpy as np
import jax
import jax.numpy as jnp
from jax import lax
from jax.experimental import pallas as pl
from jax.experimental.pallas import tpu as pltpu


def glore_kernel(x_ref, mu0T_ref, e_c1w_ref, e_c2w_ref, proj_w_ref, proj_b_ref,
                 bias_c_ref, g1wT_ref, g1b_ref, g2w_ref, ce_w_ref, out_ref,
                 x2_s, xsr_s, *, n_batch, n_state, n_node, spatial):
    f32 = jnp.float32
    S, Nn, L = n_state, n_node, spatial
    BL = n_batch * L

    # ---- parameters, loaded once per grid step --------------------------
    mu0T = mu0T_ref[...]          # (K, C)  K == Nn bases (pre-transposed on host)
    e_c1w = e_c1w_ref[...]        # (C, C)
    e_c2w = e_c2w_ref[...]        # (C, C)  SyncBN scale folded into rows
    proj_w = proj_w_ref[...]      # (S+Nn+1, C) fused conv_state/conv_proj/conv_proj1
    g1wT = g1wT_ref[...]          # (Nn+1, Nn+1) pre-transposed GCN conv1 weight
    g2w = g2w_ref[...]            # (S, S)
    ce_w = ce_w_ref[...]          # (C, S)  blocker-BN scale folded into rows
    bias_c = bias_c_ref[...]      # (C, 3) = [e_c1b | e_bnb | blk_b]
    C = e_c1w.shape[0]

    # Bias broadcasts hoisted out of the EMAU passes / per-image loops and
    # materialized once per grid step (JAX does not CSE broadcast_in_dim).
    e_c1b = jnp.broadcast_to(bias_c[:, 0:1], (C, BL))
    e_bnb = jnp.broadcast_to(bias_c[:, 1:2], (C, BL))
    blk_b = jnp.broadcast_to(bias_c[:, 2:3], (C, BL))
    proj_b = jnp.broadcast_to(proj_b_ref[...], (S + Nn + 1, BL))
    g1b = jnp.broadcast_to(g1b_ref[...], (S, Nn + 1))

    NT = (((1,), (1,)), ((), ()))   # contract last (lane) dims of both operands

    def emau(xin):
        # EMAU with stage_num = 1.  The 1x1 convs run on the whole
        # (C, n_batch*L) slab (one MXU pass each); only the per-image
        # attention reductions over L need the short per-image loop.
        x1 = jnp.dot(e_c1w, xin, preferred_element_type=f32) + e_c1b         # (C, BL)
        zT = jnp.dot(mu0T, x1, preferred_element_type=f32)                   # (K, BL)
        zT = zT - jnp.max(zT, axis=0, keepdims=True)
        ez = jnp.exp(zT)
        zT = ez * pl.reciprocal(jnp.sum(ez, axis=0, keepdims=True),
                                approx=True)                                 # softmax over K
        for b in range(n_batch):            # static, 128-aligned lane slices
            sl = slice(b * L, (b + 1) * L)
            z_b, x1_b = zT[:, sl], x1[:, sl]                                 # (K, L), (C, L)
            z_n = z_b * pl.reciprocal(1e-6 + jnp.sum(z_b, axis=1, keepdims=True),
                                      approx=True)                           # normalize over L
            mu = lax.dot_general(x1_b, z_n, NT, preferred_element_type=f32)  # (C, K)
            mu = mu * lax.rsqrt(jnp.sum(mu * mu, axis=0, keepdims=True) + 1e-12)
            x2_s[:, pl.ds(b * L, L)] = jnp.maximum(
                jnp.dot(mu, z_b, preferred_element_type=f32), 0.0)           # (C, L)
        x3 = jnp.dot(e_c2w, x2_s[...], preferred_element_type=f32) + e_bnb   # conv2 + folded BN
        return jnp.maximum(x3 + xin, 0.0)

    xin = x_ref[...].astype(f32)                                             # (C, BL)
    x = emau(xin)

    # Fused conv_state / conv_proj / conv_proj1: one batched MXU pass.
    xproj = jnp.dot(proj_w, x, preferred_element_type=f32) + proj_b          # (S+Nn+1, BL)

    for b in range(n_batch):                # tiny per-image GCN
        sl = slice(b * L, (b + 1) * L)
        xs_b = xproj[:S, sl]                                                 # (S, L)
        xp_b = xproj[S:, sl]                                                 # (Nn+1, L) = [proj; proj1]
        # x_n_state and x_n_state1 in one NT dot == concat([xn, xn1], axis=-1)
        xn = lax.dot_general(xs_b, xp_b, NT, preferred_element_type=f32)     # (S, Nn+1)
        h = jnp.dot(xn, g1wT, preferred_element_type=f32) + g1b              # GCN conv1 + bias
        h = jnp.maximum(h + xn, 0.0)                                         # residual -> relu
        xrel = jnp.dot(g2w, h, preferred_element_type=f32)[:, :Nn]           # conv2, drop node 16
        xsr_s[:, pl.ds(b * L, L)] = jnp.dot(xrel, xp_b[:Nn],
                                            preferred_element_type=f32)      # (S, L)

    xe = jnp.dot(ce_w, xsr_s[...], preferred_element_type=f32) + blk_b       # conv_extend + folded BN
    out_ref[...] = emau(x + xe).astype(out_ref.dtype)                        # second EMAU


def init_params(key, num_in, num_mid):
    C, Nn, S = num_in, num_mid, 2 * num_mid
    K = Nn
    k = jax.random.split(key, 16)
    f32 = jnp.float32

    def nrm(kk, shape, std):
        return (jax.random.normal(kk, shape, f32) * std).astype(f32)

    eps_sbn = 1e-5   # SynchronizedBatchNorm2d default eps
    eps_blk = 1e-4   # blocker BatchNorm2d eps

    mu = nrm(k[0], (C, K), float(np.sqrt(2.0 / K)))
    mu = mu / (1e-6 + jnp.sqrt(jnp.sum(mu * mu, axis=0, keepdims=True)))

    raw = dict(
        mu=mu,
        e_c1w=nrm(k[1], (C, C), float(np.sqrt(2.0 / C))),
        e_c1b=nrm(k[2], (C, 1), 0.05),
        e_c2w=nrm(k[3], (C, C), float(np.sqrt(2.0 / C))),
        e_bns=jnp.full((C, 1), 1.0 / np.sqrt(1.0 + eps_sbn), f32),
        e_bnb=jnp.zeros((C, 1), f32),
        cs_w=nrm(k[4], (S, C), 0.1),  cs_b=nrm(k[5], (S, 1), 0.05),
        cp_w=nrm(k[6], (Nn, C), 0.1), cp_b=nrm(k[7], (Nn, 1), 0.05),
        cp1_w=nrm(k[8], (C, 1), 0.1), cp1_b=nrm(k[9], (1, 1), 0.05),
        g1w=nrm(k[10], (Nn + 1, Nn + 1), 0.1),
        g1b=nrm(k[11], (Nn + 1,), 0.05),
        g2w=nrm(k[12], (S, S), 0.1),
        ce_w=nrm(k[13], (C, S), 0.1),
        blk_s=jnp.full((C, 1), 1.0 / np.sqrt(1.0 + eps_blk), f32),
        blk_b=jnp.zeros((C, 1), f32),
    )
    return raw


def kernel_params(raw, num_mid):
    """Host-side packing / folding of the raw parameters for the kernel."""
    Nn = num_mid
    mu0T = raw['mu'].T                                           # (K, C)
    e_c2w_bn = raw['e_c2w'] * raw['e_bns']                       # fold SyncBN scale (eval mode)
    ce_w_bn = raw['ce_w'] * raw['blk_s']                         # fold blocker-BN scale
    proj_w = jnp.concatenate([raw['cs_w'], raw['cp_w'], raw['cp1_w'].T], axis=0)  # (S+Nn+1, C)
    proj_b = jnp.concatenate([raw['cs_b'], raw['cp_b'], raw['cp1_b']], axis=0)    # (S+Nn+1, 1)
    bias_c = jnp.concatenate([raw['e_c1b'], raw['e_bnb'], raw['blk_b']], axis=1)  # (C, 3)
    g1wT = raw['g1w'].T                                          # (Nn+1, Nn+1)
    g1b = raw['g1b'].reshape(1, Nn + 1)
    return (mu0T, raw['e_c1w'], e_c2w_bn, proj_w, proj_b, bias_c,
            g1wT, g1b, raw['g2w'], ce_w_bn)


def pick_batch_block(n, max_block=8):
    """Grid-length heuristic.

    Per-grid-step overhead (~0.4 us) dominates at these shapes, so use as few
    steps as possible, but (a) cap the block so the in-kernel per-image unroll
    and VMEM scratch stay bounded, and (b) on 2-TensorCore chips (v7x) keep
    the grid length >= 2 so the "parallel" dimension actually spans both
    cores (with a single step one TC would idle).
    """
    kind = ""
    try:
        kind = jax.devices()[0].device_kind.lower()
    except Exception:
        pass
    min_steps = 2 if (("v7" in kind or "7x" in kind) and n >= 2) else 1
    bb = 1
    for cand in range(1, min(n, max_block) + 1):
        if n % cand == 0 and n // cand >= min_steps:
            bb = cand
    return bb


def glore_unit_pallas(x_nchw, raw, num_mid, *, batch_block=None,
                      io_dtype=jnp.float32):
    N, C, H, W = x_nchw.shape
    L = H * W
    # The forward hard-codes dropping graph node index 16 after the GCN.
    assert num_mid == 16, "GloRe_Unit forward requires num_mid == 16"
    # Lane-dense layout: every per-image (., L) slice must start on a
    # 128-lane boundary.
    assert L % 128 == 0, "pad H*W to a multiple of 128 (TODO: pad+mask path)"
    if batch_block is None:
        batch_block = pick_batch_block(N)
    assert N % batch_block == 0
    S, Nn = 2 * num_mid, num_mid
    BL = batch_block * L

    # (N, C, H, W) -> (C, N*L): channels on sublanes, batch folded into the
    # lane axis so each 1x1 conv is ONE (C_out, C) x (C, batch_block*L) matmul.
    # io_dtype=bfloat16 halves HBM<->VMEM streaming at production C*L.
    x_cl = jnp.transpose(x_nchw.reshape(N, C, L), (1, 0, 2)).reshape(C, N * L)
    x_cl = x_cl.astype(io_dtype)

    params = kernel_params(raw, num_mid)

    kernel = functools.partial(glore_kernel, n_batch=batch_block,
                               n_state=S, n_node=Nn, spatial=L)

    in_specs = [pl.BlockSpec((C, BL), lambda g: (0, g))]
    # Constant index_map: params are DMA'd once and stay VMEM-resident across
    # grid steps.  TODO(synk): at production C mark these single-buffered
    # (pipeline_mode=pl.Buffered(1)) to drop the second VMEM copy on v7x.
    in_specs += [pl.BlockSpec(p.shape, lambda g: (0, 0)) for p in params]

    out = pl.pallas_call(
        kernel,
        out_shape=jax.ShapeDtypeStruct((C, N * L), io_dtype),
        grid_spec=pltpu.PrefetchScalarGridSpec(
            num_scalar_prefetch=0,
            grid=(N // batch_block,),
            in_specs=in_specs,
            out_specs=pl.BlockSpec((C, BL), lambda g: (0, g)),
            scratch_shapes=[
                pltpu.VMEM((C, BL), jnp.float32),   # x2 slab (EMAU)
                pltpu.VMEM((S, BL), jnp.float32),   # x_state_reshaped slab (GCN out)
            ],
        ),
        compiler_params=pltpu.CompilerParams(
            # Batch elements are independent: "parallel" lets v7x shard the
            # grid across its 2 TensorCores (no-op on single-TC v5e/v6e).
            dimension_semantics=("parallel",),
            # Explicit budget so the same block shapes fit v7x's 64 MiB VMEM.
            vmem_limit_bytes=48 * 1024 * 1024,
        ),
    )(x_cl, *params)

    out = out.astype(jnp.float32)
    return jnp.transpose(out.reshape(C, N, L), (1, 0, 2)).reshape(N, C, H, W)


def _softmax_lastdim(z):
    zmax = jnp.max(z, axis=-1, keepdims=True)
    ez = jnp.exp(z - zmax)
    return ez / jnp.sum(ez, axis=-1, keepdims=True)


def glore_unit_reference(x_nchw, raw, num_mid):
    """Literal pure-JAX reference (concat + node!=16 drop) for validation."""
    N, C, H, W = x_nchw.shape
    L = H * W
    Nn = num_mid
    x2d = x_nchw.reshape(N, C, L).astype(jnp.float32)
    mu0 = raw['mu']

    def emau(xin):
        x1 = raw['e_c1w'] @ xin + raw['e_c1b']
        z = _softmax_lastdim(x1.T @ mu0)
        z_n = z / (1e-6 + z.sum(axis=0, keepdims=True))
        mu = x1 @ z_n
        mu = mu / (1e-6 + jnp.sqrt((mu * mu).sum(axis=0, keepdims=True)))
        x2 = jnp.maximum(mu @ z.T, 0.0)
        x3 = (raw['e_c2w'] @ x2) * raw['e_bns'] + raw['e_bnb']
        return jnp.maximum(x3 + xin, 0.0)

    def one(xb):
        x = emau(xb)
        xs = raw['cs_w'] @ x + raw['cs_b']
        xp = raw['cp_w'] @ x + raw['cp_b']
        xp1 = (raw['cp1_w'] * x).sum(axis=0, keepdims=True) + raw['cp1_b']
        xn = xs @ xp.T
        xn1 = xs @ xp1.T
        xcat = jnp.concatenate([xn, xn1], axis=1)                 # (S, Nn+1)
        h = xcat @ raw['g1w'].T + raw['g1b'][None, :]             # GCN conv1
        h = h + xcat
        h = raw['g2w'] @ jnp.maximum(h, 0.0)                      # GCN conv2
        keep = np.nonzero(np.arange(Nn + 1) != 16)[0]             # drop node 16
        xrel = h[:, keep]
        xsr = xrel @ xp
        xe = (raw['ce_w'] @ xsr) * raw['blk_s'] + raw['blk_b']
        return emau(x + xe)

    return jax.vmap(one)(x2d).reshape(N, C, H, W)


if __name__ == "__main__":
    key = jax.random.PRNGKey(0)
    kx, kp = jax.random.split(key)

    # num_mid must be 16: the forward hard-codes dropping graph node index 16.
    num_in, num_mid = 4, 16
    N, H, W = 2, 16, 16

    x = jax.random.normal(kx, (N, num_in, H, W), jnp.float32)
    raw = init_params(kp, num_in, num_mid)
    ref = glore_unit_reference(x, raw, num_mid)

    # batch_block=N -> single grid step (1-TC chips); batch_block=N//2 -> two
    # "parallel" steps (2-TC v7x); pick_batch_block chooses automatically.
    bb_auto = pick_batch_block(N)
    for bb in sorted({1, N, bb_auto}):
        out = jax.block_until_ready(
            glore_unit_pallas(x, raw, num_mid, batch_block=bb))
        assert out.shape == (N, num_in, H, W)
        rel_err = float(jnp.max(jnp.abs(out - ref)) / (jnp.max(jnp.abs(ref)) + 1e-6))
        assert rel_err < 1e-2, f"batch_block={bb}: rel-max-err={rel_err}"

    # bf16 HBM I/O path (halves input/output DMA bytes; compute stays f32).
    out_bf16 = jax.block_until_ready(
        glore_unit_pallas(x, raw, num_mid, batch_block=bb_auto,
                          io_dtype=jnp.bfloat16))
    rel_err = float(jnp.max(jnp.abs(out_bf16 - ref)) / (jnp.max(jnp.abs(ref)) + 1e-6))
    assert rel_err < 6e-2, f"bf16 io: rel-max-err={rel_err}"

    print("KERNEL_OK")
</pallas_src>

<mosaic_0001>
module attributes {stable_mosaic.version = 11 : i64} {
  func.func @glore_kernel(%arg0: i32, %arg1: memref<4x256xf32, #tpu.memory_space<vmem>>, %arg2: memref<16x4xf32, #tpu.memory_space<vmem>>, %arg3: memref<4x4xf32, #tpu.memory_space<vmem>>, %arg4: memref<4x4xf32, #tpu.memory_space<vmem>>, %arg5: memref<49x4xf32, #tpu.memory_space<vmem>>, %arg6: memref<49x1xf32, #tpu.memory_space<vmem>>, %arg7: memref<4x3xf32, #tpu.memory_space<vmem>>, %arg8: memref<17x17xf32, #tpu.memory_space<vmem>>, %arg9: memref<1x17xf32, #tpu.memory_space<vmem>>, %arg10: memref<32x32xf32, #tpu.memory_space<vmem>>, %arg11: memref<4x32xf32, #tpu.memory_space<vmem>>, %arg12: memref<4x256xf32, #tpu.memory_space<vmem>>, %arg13: memref<4x256xf32, #tpu.memory_space<vmem>>, %arg14: memref<32x256xf32, #tpu.memory_space<vmem>>) attributes {dimension_semantics = [#tpu.dimension_semantics<parallel>], iteration_bounds = array<i64: 2>, scalar_prefetch = 0 : i64, scratch_operands = 2 : i64, tpu.core_type = #tpu.core_type<tc>, window_params = [{transform_indices = @transform_0, window_bounds = array<i64: 4, 256>}, {pipeline_mode = #tpu.pipeline_mode<synchronous>, transform_indices = @transform_1, window_bounds = array<i64: 16, 4>}, {pipeline_mode = #tpu.pipeline_mode<synchronous>, transform_indices = @transform_2, window_bounds = array<i64: 4, 4>}, {pipeline_mode = #tpu.pipeline_mode<synchronous>, transform_indices = @transform_3, window_bounds = array<i64: 4, 4>}, {pipeline_mode = #tpu.pipeline_mode<synchronous>, transform_indices = @transform_4, window_bounds = array<i64: 49, 4>}, {pipeline_mode = #tpu.pipeline_mode<synchronous>, transform_indices = @transform_5, window_bounds = array<i64: 49, 1>}, {pipeline_mode = #tpu.pipeline_mode<synchronous>, transform_indices = @transform_6, window_bounds = array<i64: 4, 3>}, {pipeline_mode = #tpu.pipeline_mode<synchronous>, transform_indices = @transform_7, window_bounds = array<i64: 17, 17>}, {pipeline_mode = #tpu.pipeline_mode<synchronous>, transform_indices = @transform_8, window_bounds = array<i64: 1, 17>}, {pipeline_mode = #tpu.pipeline_mode<synchronous>, transform_indices = @transform_9, window_bounds = array<i64: 32, 32>}, {pipeline_mode = #tpu.pipeline_mode<synchronous>, transform_indices = @transform_10, window_bounds = array<i64: 4, 32>}, {transform_indices = @transform_11, window_bounds = array<i64: 4, 256>}]} {
    %c0 = arith.constant 0 : index
    %c0_0 = arith.constant 0 : index
    %0 = vector.load %arg2[%c0, %c0_0] : memref<16x4xf32, #tpu.memory_space<vmem>>, vector<16x4xf32>
    %c0_1 = arith.constant 0 : index
    %c0_2 = arith.constant 0 : index
    %1 = vector.load %arg3[%c0_1, %c0_2] : memref<4x4xf32, #tpu.memory_space<vmem>>, vector<4x4xf32>
    %c0_3 = arith.constant 0 : index
    %c0_4 = arith.constant 0 : index
    %2 = vector.load %arg4[%c0_3, %c0_4] : memref<4x4xf32, #tpu.memory_space<vmem>>, vector<4x4xf32>
    %c0_5 = arith.constant 0 : index
    %c0_6 = arith.constant 0 : index
    %3 = vector.load %arg5[%c0_5, %c0_6] : memref<49x4xf32, #tpu.memory_space<vmem>>, vector<49x4xf32>
    %c0_7 = arith.constant 0 : index
    %c0_8 = arith.constant 0 : index
    %4 = vector.load %arg8[%c0_7, %c0_8] : memref<17x17xf32, #tpu.memory_space<vmem>>, vector<17x17xf32>
    %c0_9 = arith.constant 0 : index
    %c0_10 = arith.constant 0 : index
    %5 = vector.load %arg10[%c0_9, %c0_10] : memref<32x32xf32, #tpu.memory_space<vmem>>, vector<32x32xf32>
    %c0_11 = arith.constant 0 : index
    %c0_12 = arith.constant 0 : index
    %6 = vector.load %arg11[%c0_11, %c0_12] : memref<4x32xf32, #tpu.memory_space<vmem>>, vector<4x32xf32>
    %c0_13 = arith.constant 0 : index
    %c0_14 = arith.constant 0 : index
    %7 = vector.load %arg7[%c0_13, %c0_14] : memref<4x3xf32, #tpu.memory_space<vmem>>, vector<4x3xf32>
    %8 = vector.extract_strided_slice %7 {offsets = [0, 0], sizes = [4, 1], strides = [1, 1]} : vector<4x3xf32> to vector<4x1xf32>
    %9 = vector.shape_cast %8 : vector<4x1xf32> to vector<4x1xf32>
    %10 = vector.broadcast %9 : vector<4x1xf32> to vector<4x256xf32>
    %11 = vector.extract_strided_slice %7 {offsets = [0, 1], sizes = [4, 1], strides = [1, 1]} : vector<4x3xf32> to vector<4x1xf32>
    %12 = vector.shape_cast %11 : vector<4x1xf32> to vector<4x1xf32>
    %13 = vector.broadcast %12 : vector<4x1xf32> to vector<4x256xf32>
    %14 = vector.extract_strided_slice %7 {offsets = [0, 2], sizes = [4, 1], strides = [1, 1]} : vector<4x3xf32> to vector<4x1xf32>
    %15 = vector.shape_cast %14 : vector<4x1xf32> to vector<4x1xf32>
    %16 = vector.broadcast %15 : vector<4x1xf32> to vector<4x256xf32>
    %c0_15 = arith.constant 0 : index
    %c0_16 = arith.constant 0 : index
    %17 = vector.load %arg6[%c0_15, %c0_16] : memref<49x1xf32, #tpu.memory_space<vmem>>, vector<49x1xf32>
    %18 = vector.shape_cast %17 : vector<49x1xf32> to vector<49x1xf32>
    %19 = vector.broadcast %18 : vector<49x1xf32> to vector<49x256xf32>
    %c0_17 = arith.constant 0 : index
    %c0_18 = arith.constant 0 : index
    %20 = vector.load %arg9[%c0_17, %c0_18] : memref<1x17xf32, #tpu.memory_space<vmem>>, vector<1x17xf32>
    %21 = vector.shape_cast %20 : vector<1x17xf32> to vector<1x17xf32>
    %22 = vector.broadcast %21 : vector<1x17xf32> to vector<32x17xf32>
    %c0_19 = arith.constant 0 : index
    %c0_20 = arith.constant 0 : index
    %23 = vector.load %arg1[%c0_19, %c0_20] : memref<4x256xf32, #tpu.memory_space<vmem>>, vector<4x256xf32>
    %cst = arith.constant dense<0.000000e+00> : vector<4x256xf32>
    %24 = tpu.matmul %1, %23, %cst {dimension_numbers = #tpu.dot_dimension_numbers<[1], [0], [0], [1], [0, 0, 1, 1], [], []>} : vector<4x4xf32>, vector<4x256xf32>, vector<4x256xf32> -> vector<4x256xf32>
    %25 = arith.addf %24, %10 : vector<4x256xf32>
    %cst_21 = arith.constant dense<0.000000e+00> : vector<16x256xf32>
    %26 = tpu.matmul %0, %25, %cst_21 {dimension_numbers = #tpu.dot_dimension_numbers<[1], [0], [0], [1], [0, 0, 1, 1], [], []>} : vector<16x4xf32>, vector<4x256xf32>, vector<16x256xf32> -> vector<16x256xf32>
    %cst_22 = arith.constant dense<0xFF800000> : vector<256xf32>
    %27 = vector.multi_reduction <maximumf>, %26, %cst_22 [0] : vector<16x256xf32> to vector<256xf32>
    %28 = vector.shape_cast %27 : vector<256xf32> to vector<1x256xf32>
    %29 = vector.broadcast %28 : vector<1x256xf32> to vector<16x256xf32>
    %30 = arith.subf %26, %29 : vector<16x256xf32>
    %31 = math.exp %30 : vector<16x256xf32>
    %cst_23 = arith.constant dense<0.000000e+00> : vector<256xf32>
    %32 = vector.multi_reduction <add>, %31, %cst_23 [0] : vector<16x256xf32> to vector<256xf32>
    %33 = vector.shape_cast %32 : vector<256xf32> to vector<1x256xf32>
    %34 = tpu.reciprocal %33 {approx = true} : vector<1x256xf32> -> vector<1x256xf32>
    %35 = vector.broadcast %34 : vector<1x256xf32> to vector<16x256xf32>
    %36 = arith.mulf %31, %35 : vector<16x256xf32>
    %cst_24 = arith.constant dense<0.000000e+00> : vector<16xf32>
    %37 = vector.multi_reduction <add>, %36, %cst_24 [1] : vector<16x256xf32> to vector<16xf32>
    %38 = vector.shape_cast %37 : vector<16xf32> to vector<16x1xf32>
    %cst_25 = arith.constant 9.99999997E-7 : f32
    %39 = vector.broadcast %cst_25 : f32 to vector<16x1xf32>
    %40 = arith.addf %39, %38 : vector<16x1xf32>
    %41 = tpu.reciprocal %40 {approx = true} : vector<16x1xf32> -> vector<16x1xf32>
    %42 = vector.broadcast %41 : vector<16x1xf32> to vector<16x256xf32>
    %43 = arith.mulf %36, %42 : vector<16x256xf32>
    %cst_26 = arith.constant dense<0.000000e+00> : vector<4x16xf32>
    %44 = tpu.matmul %25, %43, %cst_26 {dimension_numbers = #tpu.dot_dimension_numbers<[1], [1], [0], [0], [0, 0, 1, 0], [], []>} : vector<4x256xf32>, vector<16x256xf32>, vector<4x16xf32> -> vector<4x16xf32>
    %45 = arith.mulf %44, %44 : vector<4x16xf32>
    %cst_27 = arith.constant dense<0.000000e+00> : vector<16xf32>
    %46 = vector.multi_reduction <add>, %45, %cst_27 [0] : vector<4x16xf32> to vector<16xf32>
    %47 = vector.shape_cast %46 : vector<16xf32> to vector<1x16xf32>
    %cst_28 = arith.constant 9.99999996E-13 : f32
    %48 = vector.broadcast %cst_28 : f32 to vector<1x16xf32>
    %49 = arith.addf %47, %48 : vector<1x16xf32>
    %50 = math.rsqrt %49 : vector<1x16xf32>
    %51 = vector.broadcast %50 : vector<1x16xf32> to vector<4x16xf32>
    %52 = arith.mulf %44, %51 : vector<4x16xf32>
    %cst_29 = arith.constant dense<0.000000e+00> : vector<4x256xf32>
    %53 = tpu.matmul %52, %36, %cst_29 {dimension_numbers = #tpu.dot_dimension_numbers<[1], [0], [0], [1], [0, 0, 1, 1], [], []>} : vector<4x16xf32>, vector<16x256xf32>, vector<4x256xf32> -> vector<4x256xf32>
    %cst_30 = arith.constant 0.000000e+00 : f32
    %54 = vector.broadcast %cst_30 : f32 to vector<4x256xf32>
    %55 = arith.maximumf %53, %54 : vector<4x256xf32>
    %c0_31 = arith.constant 0 : index
    %c0_32 = arith.constant 0 : index
    %56 = vector.load %arg13[%c0_31, %c0_32] : memref<4x256xf32, #tpu.memory_space<vmem>>, vector<4x256xf32>
    tpu.vector_store %arg13[%c0_31, %c0_32], %55 {strides = array<i32>} : memref<4x256xf32, #tpu.memory_space<vmem>>, vector<4x256xf32>,
    %c0_33 = arith.constant 0 : index
    %c0_34 = arith.constant 0 : index
    %57 = vector.load %arg13[%c0_33, %c0_34] : memref<4x256xf32, #tpu.memory_space<vmem>>, vector<4x256xf32>
    %cst_35 = arith.constant dense<0.000000e+00> : vector<4x256xf32>
    %58 = tpu.matmul %2, %57, %cst_35 {dimension_numbers = #tpu.dot_dimension_numbers<[1], [0], [0], [1], [0, 0, 1, 1], [], []>} : vector<4x4xf32>, vector<4x256xf32>, vector<4x256xf32> -> vector<4x256xf32>
    %59 = arith.addf %58, %13 : vector<4x256xf32>
    %60 = arith.addf %59, %23 : vector<4x256xf32>
    %cst_36 = arith.constant 0.000000e+00 : f32
    %61 = vector.broadcast %cst_36 : f32 to vector<4x256xf32>
    %62 = arith.maximumf %60, %61 : vector<4x256xf32>
    %cst_37 = arith.constant dense<0.000000e+00> : vector<49x256xf32>
    %63 = tpu.matmul %3, %62, %cst_37 {dimension_numbers = #tpu.dot_dimension_numbers<[1], [0], [0], [1], [0, 0, 1, 1], [], []>} : vector<49x4xf32>, vector<4x256xf32>, vector<49x256xf32> -> vector<49x256xf32>
    %64 = arith.addf %63, %19 : vector<49x256xf32>
    %65 = vector.extract_strided_slice %64 {offsets = [0, 0], sizes = [32, 256], strides = [1, 1]} : vector<49x256xf32> to vector<32x256xf32>
    %66 = vector.extract_strided_slice %64 {offsets = [32, 0], sizes = [17, 256], strides = [1, 1]} : vector<49x256xf32> to vector<17x256xf32>
    %cst_38 = arith.constant dense<0.000000e+00> : vector<32x17xf32>
    %67 = tpu.matmul %65, %66, %cst_38 {dimension_numbers = #tpu.dot_dimension_numbers<[1], [1], [0], [0], [0, 0, 1, 0], [], []>} : vector<32x256xf32>, vector<17x256xf32>, vector<32x17xf32> -> vector<32x17xf32>
    %cst_39 = arith.constant dense<0.000000e+00> : vector<32x17xf32>
    %68 = tpu.matmul %67, %4, %cst_39 {dimension_numbers = #tpu.dot_dimension_numbers<[1], [0], [0], [1], [0, 0, 1, 1], [], []>} : vector<32x17xf32>, vector<17x17xf32>, vector<32x17xf32> -> vector<32x17xf32>
    %69 = arith.addf %68, %22 : vector<32x17xf32>
    %70 = arith.addf %69, %67 : vector<32x17xf32>
    %cst_40 = arith.constant 0.000000e+00 : f32
    %71 = vector.broadcast %cst_40 : f32 to vector<32x17xf32>
    %72 = arith.maximumf %70, %71 : vector<32x17xf32>
    %cst_41 = arith.constant dense<0.000000e+00> : vector<32x17xf32>
    %73 = tpu.matmul %5, %72, %cst_41 {dimension_numbers = #tpu.dot_dimension_numbers<[1], [0], [0], [1], [0, 0, 1, 1], [], []>} : vector<32x32xf32>, vector<32x17xf32>, vector<32x17xf32> -> vector<32x17xf32>
    %74 = vector.extract_strided_slice %73 {offsets = [0, 0], sizes = [32, 16], strides = [1, 1]} : vector<32x17xf32> to vector<32x16xf32>
    %75 = vector.extract_strided_slice %66 {offsets = [0, 0], sizes = [16, 256], strides = [1, 1]} : vector<17x256xf32> to vector<16x256xf32>
    %cst_42 = arith.constant dense<0.000000e+00> : vector<32x256xf32>
    %76 = tpu.matmul %74, %75, %cst_42 {dimension_numbers = #tpu.dot_dimension_numbers<[1], [0], [0], [1], [0, 0, 1, 1], [], []>} : vector<32x16xf32>, vector<16x256xf32>, vector<32x256xf32> -> vector<32x256xf32>
    %c0_43 = arith.constant 0 : index
    %c0_44 = arith.constant 0 : index
    %77 = vector.load %arg14[%c0_43, %c0_44] : memref<32x256xf32, #tpu.memory_space<vmem>>, vector<32x256xf32>
    tpu.vector_store %arg14[%c0_43, %c0_44], %76 {strides = array<i32>} : memref<32x256xf32, #tpu.memory_space<vmem>>, vector<32x256xf32>,
    %c0_45 = arith.constant 0 : index
    %c0_46 = arith.constant 0 : index
    %78 = vector.load %arg14[%c0_45, %c0_46] : memref<32x256xf32, #tpu.memory_space<vmem>>, vector<32x256xf32>
    %cst_47 = arith.constant dense<0.000000e+00> : vector<4x256xf32>
    %79 = tpu.matmul %6, %78, %cst_47 {dimension_numbers = #tpu.dot_dimension_numbers<[1], [0], [0], [1], [0, 0, 1, 1], [], []>} : vector<4x32xf32>, vector<32x256xf32>, vector<4x256xf32> -> vector<4x256xf32>
    %80 = arith.addf %79, %16 : vector<4x256xf32>
    %81 = arith.addf %62, %80 : vector<4x256xf32>
    %cst_48 = arith.constant dense<0.000000e+00> : vector<4x256xf32>
    %82 = tpu.matmul %1, %81, %cst_48 {dimension_numbers = #tpu.dot_dimension_numbers<[1], [0], [0], [1], [0, 0, 1, 1], [], []>} : vector<4x4xf32>, vector<4x256xf32>, vector<4x256xf32> -> vector<4x256xf32>
    %83 = arith.addf %82, %10 : vector<4x256xf32>
    %cst_49 = arith.constant dense<0.000000e+00> : vector<16x256xf32>
    %84 = tpu.matmul %0, %83, %cst_49 {dimension_numbers = #tpu.dot_dimension_numbers<[1], [0], [0], [1], [0, 0, 1, 1], [], []>} : vector<16x4xf32>, vector<4x256xf32>, vector<16x256xf32> -> vector<16x256xf32>
    %cst_50 = arith.constant dense<0xFF800000> : vector<256xf32>
    %85 = vector.multi_reduction <maximumf>, %84, %cst_50 [0] : vector<16x256xf32> to vector<256xf32>
    %86 = vector.shape_cast %85 : vector<256xf32> to vector<1x256xf32>
    %87 = vector.broadcast %86 : vector<1x256xf32> to vector<16x256xf32>
    %88 = arith.subf %84, %87 : vector<16x256xf32>
    %89 = math.exp %88 : vector<16x256xf32>
    %cst_51 = arith.constant dense<0.000000e+00> : vector<256xf32>
    %90 = vector.multi_reduction <add>, %89, %cst_51 [0] : vector<16x256xf32> to vector<256xf32>
    %91 = vector.shape_cast %90 : vector<256xf32> to vector<1x256xf32>
    %92 = tpu.reciprocal %91 {approx = true} : vector<1x256xf32> -> vector<1x256xf32>
    %93 = vector.broadcast %92 : vector<1x256xf32> to vector<16x256xf32>
    %94 = arith.mulf %89, %93 : vector<16x256xf32>
    %cst_52 = arith.constant dense<0.000000e+00> : vector<16xf32>
    %95 = vector.multi_reduction <add>, %94, %cst_52 [1] : vector<16x256xf32> to vector<16xf32>
    %96 = vector.shape_cast %95 : vector<16xf32> to vector<16x1xf32>
    %cst_53 = arith.constant 9.99999997E-7 : f32
    %97 = vector.broadcast %cst_53 : f32 to vector<16x1xf32>
    %98 = arith.addf %97, %96 : vector<16x1xf32>
    %99 = tpu.reciprocal %98 {approx = true} : vector<16x1xf32> -> vector<16x1xf32>
    %100 = vector.broadcast %99 : vector<16x1xf32> to vector<16x256xf32>
    %101 = arith.mulf %94, %100 : vector<16x256xf32>
    %cst_54 = arith.constant dense<0.000000e+00> : vector<4x16xf32>
    %102 = tpu.matmul %83, %101, %cst_54 {dimension_numbers = #tpu.dot_dimension_numbers<[1], [1], [0], [0], [0, 0, 1, 0], [], []>} : vector<4x256xf32>, vector<16x256xf32>, vector<4x16xf32> -> vector<4x16xf32>
    %103 = arith.mulf %102, %102 : vector<4x16xf32>
    %cst_55 = arith.constant dense<0.000000e+00> : vector<16xf32>
    %104 = vector.multi_reduction <add>, %103, %cst_55 [0] : vector<4x16xf32> to vector<16xf32>
    %105 = vector.shape_cast %104 : vector<16xf32> to vector<1x16xf32>
    %cst_56 = arith.constant 9.99999996E-13 : f32
    %106 = vector.broadcast %cst_56 : f32 to vector<1x16xf32>
    %107 = arith.addf %105, %106 : vector<1x16xf32>
    %108 = math.rsqrt %107 : vector<1x16xf32>
    %109 = vector.broadcast %108 : vector<1x16xf32> to vector<4x16xf32>
    %110 = arith.mulf %102, %109 : vector<4x16xf32>
    %cst_57 = arith.constant dense<0.000000e+00> : vector<4x256xf32>
    %111 = tpu.matmul %110, %94, %cst_57 {dimension_numbers = #tpu.dot_dimension_numbers<[1], [0], [0], [1], [0, 0, 1, 1], [], []>} : vector<4x16xf32>, vector<16x256xf32>, vector<4x256xf32> -> vector<4x256xf32>
    %cst_58 = arith.constant 0.000000e+00 : f32
    %112 = vector.broadcast %cst_58 : f32 to vector<4x256xf32>
    %113 = arith.maximumf %111, %112 : vector<4x256xf32>
    %c0_59 = arith.constant 0 : index
    %c0_60 = arith.constant 0 : index
    %114 = vector.load %arg13[%c0_59, %c0_60] : memref<4x256xf32, #tpu.memory_space<vmem>>, vector<4x256xf32>
    tpu.vector_store %arg13[%c0_59, %c0_60], %113 {strides = array<i32>} : memref<4x256xf32, #tpu.memory_space<vmem>>, vector<4x256xf32>,
    %c0_61 = arith.constant 0 : index
    %c0_62 = arith.constant 0 : index
    %115 = vector.load %arg13[%c0_61, %c0_62] : memref<4x256xf32, #tpu.memory_space<vmem>>, vector<4x256xf32>
    %cst_63 = arith.constant dense<0.000000e+00> : vector<4x256xf32>
    %116 = tpu.matmul %2, %115, %cst_63 {dimension_numbers = #tpu.dot_dimension_numbers<[1], [0], [0], [1], [0, 0, 1, 1], [], []>} : vector<4x4xf32>, vector<4x256xf32>, vector<4x256xf32> -> vector<4x256xf32>
    %117 = arith.addf %116, %13 : vector<4x256xf32>
    %118 = arith.addf %117, %81 : vector<4x256xf32>
    %cst_64 = arith.constant 0.000000e+00 : f32
    %119 = vector.broadcast %cst_64 : f32 to vector<4x256xf32>
    %120 = arith.maximumf %118, %119 : vector<4x256xf32>
    %c0_65 = arith.constant 0 : index
    %c0_66 = arith.constant 0 : index
    %121 = vector.load %arg12[%c0_65, %c0_66] : memref<4x256xf32, #tpu.memory_space<vmem>>, vector<4x256xf32>
    tpu.vector_store %arg12[%c0_65, %c0_66], %120 {strides = array<i32>} : memref<4x256xf32, #tpu.memory_space<vmem>>, vector<4x256xf32>,
    return
  }
  func.func @transform_0(%arg0: i32) -> (i32, i32) {
    %c0_i32 = arith.constant 0 : i32
    %c0_i32_0 = arith.constant 0 : i32
    return %c0_i32, %arg0 : i32, i32
  }
  func.func @transform_1(%arg0: i32) -> (i32, i32) {
    %c0_i32 = arith.constant 0 : i32
    %c0_i32_0 = arith.constant 0 : i32
    %c0_i32_1 = arith.constant 0 : i32
    return %c0_i32, %c0_i32_0 : i32, i32
  }
  func.func @transform_2(%arg0: i32) -> (i32, i32) {
    %c0_i32 = arith.constant 0 : i32
    %c0_i32_0 = arith.constant 0 : i32
    %c0_i32_1 = arith.constant 0 : i32
    return %c0_i32, %c0_i32_0 : i32, i32
  }
  func.func @transform_3(%arg0: i32) -> (i32, i32) {
    %c0_i32 = arith.constant 0 : i32
    %c0_i32_0 = arith.constant 0 : i32
    %c0_i32_1 = arith.constant 0 : i32
    return %c0_i32, %c0_i32_0 : i32, i32
  }
  func.func @transform_4(%arg0: i32) -> (i32, i32) {
    %c0_i32 = arith.constant 0 : i32
    %c0_i32_0 = arith.constant 0 : i32
    %c0_i32_1 = arith.constant 0 : i32
    return %c0_i32, %c0_i32_0 : i32, i32
  }
  func.func @transform_5(%arg0: i32) -> (i32, i32) {
    %c0_i32 = arith.constant 0 : i32
    %c0_i32_0 = arith.constant 0 : i32
    %c0_i32_1 = arith.constant 0 : i32
    return %c0_i32, %c0_i32_0 : i32, i32
  }
  func.func @transform_6(%arg0: i32) -> (i32, i32) {
    %c0_i32 = arith.constant 0 : i32
    %c0_i32_0 = arith.constant 0 : i32
    %c0_i32_1 = arith.constant 0 : i32
    return %c0_i32, %c0_i32_0 : i32, i32
  }
  func.func @transform_7(%arg0: i32) -> (i32, i32) {
    %c0_i32 = arith.constant 0 : i32
    %c0_i32_0 = arith.constant 0 : i32
    %c0_i32_1 = arith.constant 0 : i32
    return %c0_i32, %c0_i32_0 : i32, i32
  }
  func.func @transform_8(%arg0: i32) -> (i32, i32) {
    %c0_i32 = arith.constant 0 : i32
    %c0_i32_0 = arith.constant 0 : i32
    %c0_i32_1 = arith.constant 0 : i32
    return %c0_i32, %c0_i32_0 : i32, i32
  }
  func.func @transform_9(%arg0: i32) -> (i32, i32) {
    %c0_i32 = arith.constant 0 : i32
    %c0_i32_0 = arith.constant 0 : i32
    %c0_i32_1 = arith.constant 0 : i32
    return %c0_i32, %c0_i32_0 : i32, i32
  }
  func.func @transform_10(%arg0: i32) -> (i32, i32) {
    %c0_i32 = arith.constant 0 : i32
    %c0_i32_0 = arith.constant 0 : i32
    %c0_i32_1 = arith.constant 0 : i32
    return %c0_i32, %c0_i32_0 : i32, i32
  }
  func.func @transform_11(%arg0: i32) -> (i32, i32) {
    %c0_i32 = arith.constant 0 : i32
    %c0_i32_0 = arith.constant 0 : i32
    return %c0_i32, %arg0 : i32, i32
  }
}

</mosaic_0001>

<llo_original>
// kernel: tpu_custom_call.1
$region0: #{tpu_custom_call.1}
  #allocation0 [shape = 'u32[]', space=smem, size = 0x4, offset = 0x4, fixed_abs, tag = 'smem constant byte address 0x4 - core index']
  #allocation1 [shape = 'u32[72,128]{1,0:T(1,128)}', space=vmem, size = 0x9000, scoped, tag = 'internal scratch']
  #allocation2 [shape = 'f32[4,256]{1,0:T(4,128)}', space=vmem, size = 0x1000, scoped, tag = 'scratch operand']
  #allocation3 [shape = 'f32[32,256]{1,0:T(8,128)}', space=vmem, size = 0x8000, scoped, tag = 'scratch operand']
  %s0 = inlined_call_operand.vmem [shape: f32[4,512], index: 0, kind: input, shape index: {}]
  %s1 = inlined_call_operand.vmem [shape: f32[16,4], index: 1, kind: input, shape index: {}]
  %s2 = inlined_call_operand.vmem [shape: f32[4,4], index: 2, kind: input, shape index: {}]
  %s3 = inlined_call_operand.vmem [shape: f32[4,4], index: 3, kind: input, shape index: {}]
  %s4 = inlined_call_operand.vmem [shape: f32[49,4], index: 4, kind: input, shape index: {}]
  %s5 = inlined_call_operand.vmem [shape: f32[49,1], index: 5, kind: input, shape index: {}]
  %s6 = inlined_call_operand.vmem [shape: f32[4,3], index: 6, kind: input, shape index: {}]
  %s7 = inlined_call_operand.vmem [shape: f32[17,17], index: 7, kind: input, shape index: {}]
  %s8 = inlined_call_operand.vmem [shape: f32[1,17], index: 8, kind: input, shape index: {}]
  %s9 = inlined_call_operand.vmem [shape: f32[32,32], index: 9, kind: input, shape index: {}]
  %s10 = inlined_call_operand.vmem [shape: f32[4,32], index: 10, kind: input, shape index: {}]
  %s11 = inlined_call_operand.hbm [shape: f32[4,512], index: 11, kind: output, shape index: {}]
  %s12 = sld [smem:[#allocation0]]
  $region77: #{tpu_custom_call.1} parent=0
    _
  %s14 = ssub.s32 1, %s12
  %s15 = scalar_select 0, %s14, %s12
  $region1: #{tpu_custom_call.1} parent=0
    #allocation4 [shape = 'u8[8192]{0}', space=vmem, size = 0x2000, scoped, tag = 'output window, operand 0']
    #allocation5 [shape = 's32[2]{0}', space=sflag, size = 0x8, scoped, tag = 'scoped memory for tpu_custom_call.1']
    %16 = vsyncpa [#allocation5], 0
    %s17 = scalar_lea.sflag [#allocation5], 1
    %18 = vsyncpa %s17, 0
    loop: start=0, step=1, limit=4
    $region2: #{tpu_custom_call.1} parent=1 // loop_pre_header
      _
    $region3: #{tpu_custom_call.1} parent=1 // loop_header
      %s20 = sphi 0, %s24
      %p21 = scmp.ge.s32.totalorder %s20, 4
      %s30 = sphi 0, %s32
      %s33 = sphi 0, %s30
      %s34 = sphi 0, %s33
      %s50 = sphi 0, %s34
      %s54 = sphi 0, %s54
      %s56 = sphi 0, %s54
      %s57 = sphi 0, %s56
      %s71 = sphi 0, %s57
      %s75 = sphi 0, %s75
      %s77 = sphi 0, %s75
      %s78 = sphi 0, %s77
      %s92 = sphi 0, %s78
      %s96 = sphi 0, %s96
      %s98 = sphi 0, %s96
      %s99 = sphi 0, %s98
      %s113 = sphi 0, %s99
      %s117 = sphi 0, %s117
      %s119 = sphi 0, %s117
      %s120 = sphi 0, %s119
      %s134 = sphi 0, %s120
      %s138 = sphi 0, %s138
      %s140 = sphi 0, %s138
      %s141 = sphi 0, %s140
      %s155 = sphi 0, %s141
      %s159 = sphi 0, %s159
      %s161 = sphi 0, %s159
      %s162 = sphi 0, %s161
      %s176 = sphi 0, %s162
      %s180 = sphi 0, %s180
      %s182 = sphi 0, %s180
      %s183 = sphi 0, %s182
      %s197 = sphi 0, %s183
      %s201 = sphi 0, %s201
      %s203 = sphi 0, %s201
      %s204 = sphi 0, %s203
      %s218 = sphi 0, %s204
      %s222 = sphi 0, %s222
      %s224 = sphi 0, %s222
      %s225 = sphi 0, %s224
      %s239 = sphi 0, %s225
      %s243 = sphi 0, %s243
      %s245 = sphi 0, %s243
      %s246 = sphi 0, %s245
      %s260 = sphi 0, %s246
      %s266 = sphi 0, %s268
      %s269 = sphi 0, %s266
      %s270 = sphi 0, %s269
      %s286 = sphi 0, %s270
    $region4: #{tpu_custom_call.1} parent=1 // loop_header_branch
      %23 = sbr.rel (%p21) target = $region8
    $region5: #{tpu_custom_call.1} parent=1 // loop_body
      %s25 = ssub.s32 %s20, 1
      %s26 = ssub.s32 %s20, 2
      %s27 = sadd.s32 %s20, 1
      %s28 = ssub.s32 %s20, %s27
      %p29 = scmp.eq.s32.totalorder %s28, 0
      %s31 = sadd.s32 %s30, 1
      %s32 = scalar_select %p29, %s30, %s31
      %p35 = pneg %p29
      %p36 = scmp.eq.s32.totalorder %s20, 1
      %p37 = por %p35, %p36
      %p38 = scmp.ne.s32.totalorder %s30, %s33
      %p39 = scmp.eq.s32.totalorder %s20, 0
      %p40 = por %p38, %p39
      %p41 = scmp.ne.s32.totalorder %s30, %s33
      %p42 = scmp.eq.s32.totalorder %s25, 1
      %p43 = por %p41, %p42
      %p44 = scmp.ne.s32.totalorder %s33, %s34
      %p45 = scmp.eq.s32.totalorder %s25, 0
      %p46 = por %p44, %p45
      %p47 = scmp.ne.s32.totalorder %s33, %s34
      %p48 = scmp.eq.s32.totalorder %s26, 1
      %p49 = por %p47, %p48
      %p51 = scmp.ne.s32.totalorder %s34, %s50
      %p52 = scmp.eq.s32.totalorder %s26, 0
      %p53 = por %p51, %p52
      %s55 = sadd.s32 %s54, 1
      %p58 = scmp.eq.s32.totalorder %s20, 1
      %p59 = scmp.ne.s32.totalorder %s54, %s56
      %p60 = scmp.eq.s32.totalorder %s20, 0
      %p61 = por %p59, %p60
      %p62 = scmp.ne.s32.totalorder %s54, %s56
      %p63 = scmp.eq.s32.totalorder %s25, 1
      %p64 = por %p62, %p63
      %p65 = scmp.ne.s32.totalorder %s56, %s57
      %p66 = scmp.eq.s32.totalorder %s25, 0
      %p67 = por %p65, %p66
      %p68 = scmp.ne.s32.totalorder %s56, %s57
      %p69 = scmp.eq.s32.totalorder %s26, 1
      %p70 = por %p68, %p69
      %p72 = scmp.ne.s32.totalorder %s57, %s71
      %p73 = scmp.eq.s32.totalorder %s26, 0
      %p74 = por %p72, %p73
      %s76 = sadd.s32 %s75, 1
      %p79 = scmp.eq.s32.totalorder %s20, 1
      %p80 = scmp.ne.s32.totalorder %s75, %s77
      %p81 = scmp.eq.s32.totalorder %s20, 0
      %p82 = por %p80, %p81
      %p83 = scmp.ne.s32.totalorder %s75, %s77
      %p84 = scmp.eq.s32.totalorder %s25, 1
      %p85 = por %p83, %p84
      %p86 = scmp.ne.s32.totalorder %s77, %s78
      %p87 = scmp.eq.s32.totalorder %s25, 0
      %p88 = por %p86, %p87
      %p89 = scmp.ne.s32.totalorder %s77, %s78
      %p90 = scmp.eq.s32.totalorder %s26, 1
      %p91 = por %p89, %p90
      %p93 = scmp.ne.s32.totalorder %s78, %s92
      %p94 = scmp.eq.s32.totalorder %s26, 0
      %p95 = por %p93, %p94
      %s97 = sadd.s32 %s96, 1
      %p100 = scmp.eq.s32.totalorder %s20, 1
      %p101 = scmp.ne.s32.totalorder %s96, %s98
      %p102 = scmp.eq.s32.totalorder %s20, 0
      %p103 = por %p101, %p102
      %p104 = scmp.ne.s32.totalorder %s96, %s98
      %p105 = scmp.eq.s32.totalorder %s25, 1
      %p106 = por %p104, %p105
      %p107 = scmp.ne.s32.totalorder %s98, %s99
      %p108 = scmp.eq.s32.totalorder %s25, 0
      %p109 = por %p107, %p108
      %p110 = scmp.ne.s32.totalorder %s98, %s99
      %p111 = scmp.eq.s32.totalorder %s26, 1
      %p112 = por %p110, %p111
      %p114 = scmp.ne.s32.totalorder %s99, %s113
      %p115 = scmp.eq.s32.totalorder %s26, 0
      %p116 = por %p114, %p115
      %s118 = sadd.s32 %s117, 1
      %p121 = scmp.eq.s32.totalorder %s20, 1
      %p122 = scmp.ne.s32.totalorder %s117, %s119
      %p123 = scmp.eq.s32.totalorder %s20, 0
      %p124 = por %p122, %p123
      %p125 = scmp.ne.s32.totalorder %s117, %s119
      %p126 = scmp.eq.s32.totalorder %s25, 1
      %p127 = por %p125, %p126
      %p128 = scmp.ne.s32.totalorder %s119, %s120
      %p129 = scmp.eq.s32.totalorder %s25, 0
      %p130 = por %p128, %p129
      %p131 = scmp.ne.s32.totalorder %s119, %s120
      %p132 = scmp.eq.s32.totalorder %s26, 1
      %p133 = por %p131, %p132
      %p135 = scmp.ne.s32.totalorder %s120, %s134
      %p136 = scmp.eq.s32.totalorder %s26, 0
      %p137 = por %p135, %p136
      %s139 = sadd.s32 %s138, 1
      %p142 = scmp.eq.s32.totalorder %s20, 1
      %p143 = scmp.ne.s32.totalorder %s138, %s140
      %p144 = scmp.eq.s32.totalorder %s20, 0
      %p145 = por %p143, %p144
      %p146 = scmp.ne.s32.totalorder %s138, %s140
      %p147 = scmp.eq.s32.totalorder %s25, 1
      %p148 = por %p146, %p147
      %p149 = scmp.ne.s32.totalorder %s140, %s141
      %p150 = scmp.eq.s32.totalorder %s25, 0
      %p151 = por %p149, %p150
      %p152 = scmp.ne.s32.totalorder %s140, %s141
      %p153 = scmp.eq.s32.totalorder %s26, 1
      %p154 = por %p152, %p153
      %p156 = scmp.ne.s32.totalorder %s141, %s155
      %p157 = scmp.eq.s32.totalorder %s26, 0
      %p158 = por %p156, %p157
      %s160 = sadd.s32 %s159, 1
      %p163 = scmp.eq.s32.totalorder %s20, 1
      %p164 = scmp.ne.s32.totalorder %s159, %s161
      %p165 = scmp.eq.s32.totalorder %s20, 0
      %p166 = por %p164, %p165
      %p167 = scmp.ne.s32.totalorder %s159, %s161
      %p168 = scmp.eq.s32.totalorder %s25, 1
      %p169 = por %p167, %p168
      %p170 = scmp.ne.s32.totalorder %s161, %s162
      %p171 = scmp.eq.s32.totalorder %s25, 0
      %p172 = por %p170, %p171
      %p173 = scmp.ne.s32.totalorder %s161, %s162
      %p174 = scmp.eq.s32.totalorder %s26, 1
      %p175 = por %p173, %p174
      %p177 = scmp.ne.s32.totalorder %s162, %s176
      %p178 = scmp.eq.s32.totalorder %s26, 0
      %p179 = por %p177, %p178
      %s181 = sadd.s32 %s180, 1
      %p184 = scmp.eq.s32.totalorder %s20, 1
      %p185 = scmp.ne.s32.totalorder %s180, %s182
      %p186 = scmp.eq.s32.totalorder %s20, 0
      %p187 = por %p185, %p186
      %p188 = scmp.ne.s32.totalorder %s180, %s182
      %p189 = scmp.eq.s32.totalorder %s25, 1
      %p190 = por %p188, %p189
      %p191 = scmp.ne.s32.totalorder %s182, %s183
      %p192 = scmp.eq.s32.totalorder %s25, 0
      %p193 = por %p191, %p192
      %p194 = scmp.ne.s32.totalorder %s182, %s183
      %p195 = scmp.eq.s32.totalorder %s26, 1
      %p196 = por %p194, %p195
      %p198 = scmp.ne.s32.totalorder %s183, %s197
      %p199 = scmp.eq.s32.totalorder %s26, 0
      %p200 = por %p198, %p199
      %s202 = sadd.s32 %s201, 1
      %p205 = scmp.eq.s32.totalorder %s20, 1
      %p206 = scmp.ne.s32.totalorder %s201, %s203
      %p207 = scmp.eq.s32.totalorder %s20, 0
      %p208 = por %p206, %p207
      %p209 = scmp.ne.s32.totalorder %s201, %s203
      %p210 = scmp.eq.s32.totalorder %s25, 1
      %p211 = por %p209, %p210
      %p212 = scmp.ne.s32.totalorder %s203, %s204
      %p213 = scmp.eq.s32.totalorder %s25, 0
      %p214 = por %p212, %p213
      %p215 = scmp.ne.s32.totalorder %s203, %s204
      %p216 = scmp.eq.s32.totalorder %s26, 1
      %p217 = por %p215, %p216
      %p219 = scmp.ne.s32.totalorder %s204, %s218
      %p220 = scmp.eq.s32.totalorder %s26, 0
      %p221 = por %p219, %p220
      %s223 = sadd.s32 %s222, 1
      %p226 = scmp.eq.s32.totalorder %s20, 1
      %p227 = scmp.ne.s32.totalorder %s222, %s224
      %p228 = scmp.eq.s32.totalorder %s20, 0
      %p229 = por %p227, %p228
      %p230 = scmp.ne.s32.totalorder %s222, %s224
      %p231 = scmp.eq.s32.totalorder %s25, 1
      %p232 = por %p230, %p231
      %p233 = scmp.ne.s32.totalorder %s224, %s225
      %p234 = scmp.eq.s32.totalorder %s25, 0
      %p235 = por %p233, %p234
      %p236 = scmp.ne.s32.totalorder %s224, %s225
      %p237 = scmp.eq.s32.totalorder %s26, 1
      %p238 = por %p236, %p237
      %p240 = scmp.ne.s32.totalorder %s225, %s239
      %p241 = scmp.eq.s32.totalorder %s26, 0
      %p242 = por %p240, %p241
      %s244 = sadd.s32 %s243, 1
      %p247 = scmp.eq.s32.totalorder %s20, 1
      %p248 = scmp.ne.s32.totalorder %s243, %s245
      %p249 = scmp.eq.s32.totalorder %s20, 0
      %p250 = por %p248, %p249
      %p251 = scmp.ne.s32.totalorder %s243, %s245
      %p252 = scmp.eq.s32.totalorder %s25, 1
      %p253 = por %p251, %p252
      %p254 = scmp.ne.s32.totalorder %s245, %s246
      %p255 = scmp.eq.s32.totalorder %s25, 0
      %p256 = por %p254, %p255
      %p257 = scmp.ne.s32.totalorder %s245, %s246
      %p258 = scmp.eq.s32.totalorder %s26, 1
      %p259 = por %p257, %p258
      %p261 = scmp.ne.s32.totalorder %s246, %s260
      %p262 = scmp.eq.s32.totalorder %s26, 0
      %p263 = por %p261, %p262
      %s264 = ssub.s32 %s20, %s27
      %p265 = scmp.eq.s32.totalorder %s264, 0
      %s267 = sadd.s32 %s266, 1
      %s268 = scalar_select %p265, %s266, %s267
      %p271 = pneg %p265
      %p272 = scmp.eq.s32.totalorder %s20, 1
      %p273 = por %p271, %p272
      %p274 = scmp.ne.s32.totalorder %s266, %s269
      %p275 = scmp.eq.s32.totalorder %s20, 0
      %p276 = por %p274, %p275
      %p277 = scmp.ne.s32.totalorder %s266, %s269
      %p278 = scmp.eq.s32.totalorder %s25, 1
      %p279 = por %p277, %p278
      %p280 = scmp.ne.s32.totalorder %s269, %s270
      %p281 = scmp.eq.s32.totalorder %s25, 0
      %p282 = por %p280, %p281
      %p283 = scmp.ne.s32.totalorder %s269, %s270
      %p284 = scmp.eq.s32.totalorder %s26, 1
      %p285 = por %p283, %p284
      %p287 = scmp.ne.s32.totalorder %s270, %s286
      %p288 = scmp.eq.s32.totalorder %s26, 0
      %p289 = por %p287, %p288
      %p290 = scmp.le.s32.totalorder 1, %s20
      %p291 = scmp.lt.s32.totalorder %s20, 3
      %p292 = pnand %p290, %p291
      %p293 = pneg %p292
      // Predicated region
      $region9: #{tpu_custom_call.1} parent=5 // pred_check
        _
      $region10: #{tpu_custom_call.1} parent=5 // pred_check_branch
        %295 = sbr.rel (%p292) target = $region12
      $region11: #{tpu_custom_call.1} parent=5 // pred_region
        %s296 = ssub.s32 %s20, 1
        // Predicated region
        $region13: #{tpu_custom_call.1} parent=11 // pred_check
          %p297 = pneg %p67
        $region14: #{tpu_custom_call.1} parent=11 // pred_check_branch
          %299 = sbr.rel (%p297) target = $region16
        $region15: #{tpu_custom_call.1} parent=11 // pred_region
          _
        $region16: #{tpu_custom_call.1} parent=11 // pred_fallthru
          _
        // Predicated region
        $region17: #{tpu_custom_call.1} parent=11 // pred_check
          %p300 = pneg %p88
        $region18: #{tpu_custom_call.1} parent=11 // pred_check_branch
          %302 = sbr.rel (%p300) target = $region20
        $region19: #{tpu_custom_call.1} parent=11 // pred_region
          _
        $region20: #{tpu_custom_call.1} parent=11 // pred_fallthru
          _
        // Predicated region
        $region21: #{tpu_custom_call.1} parent=11 // pred_check
          %p303 = pneg %p109
        $region22: #{tpu_custom_call.1} parent=11 // pred_check_branch
          %305 = sbr.rel (%p303) target = $region24
        $region23: #{tpu_custom_call.1} parent=11 // pred_region
          _
        $region24: #{tpu_custom_call.1} parent=11 // pred_fallthru
          _
        // Predicated region
        $region25: #{tpu_custom_call.1} parent=11 // pred_check
          %p306 = pneg %p130
        $region26: #{tpu_custom_call.1} parent=11 // pred_check_branch
          %308 = sbr.rel (%p306) target = $region28
        $region27: #{tpu_custom_call.1} parent=11 // pred_region
          _
        $region28: #{tpu_custom_call.1} parent=11 // pred_fallthru
          _
        // Predicated region
        $region29: #{tpu_custom_call.1} parent=11 // pred_check
          %p309 = pneg %p151
        $region30: #{tpu_custom_call.1} parent=11 // pred_check_branch
          %311 = sbr.rel (%p309) target = $region32
        $region31: #{tpu_custom_call.1} parent=11 // pred_region
          _
        $region32: #{tpu_custom_call.1} parent=11 // pred_fallthru
          _
        // Predicated region
        $region33: #{tpu_custom_call.1} parent=11 // pred_check
          %p312 = pneg %p172
        $region34: #{tpu_custom_call.1} parent=11 // pred_check_branch
          %314 = sbr.rel (%p312) target = $region36
        $region35: #{tpu_custom_call.1} parent=11 // pred_region
          _
        $region36: #{tpu_custom_call.1} parent=11 // pred_fallthru
          _
        // Predicated region
        $region37: #{tpu_custom_call.1} parent=11 // pred_check
          %p315 = pneg %p193
        $region38: #{tpu_custom_call.1} parent=11 // pred_check_branch
          %317 = sbr.rel (%p315) target = $region40
        $region39: #{tpu_custom_call.1} parent=11 // pred_region
          _
        $region40: #{tpu_custom_call.1} parent=11 // pred_fallthru
          _
        // Predicated region
        $region41: #{tpu_custom_call.1} parent=11 // pred_check
          %p318 = pneg %p214
        $region42: #{tpu_custom_call.1} parent=11 // pred_check_branch
          %320 = sbr.rel (%p318) target = $region44
        $region43: #{tpu_custom_call.1} parent=11 // pred_region
          _
        $region44: #{tpu_custom_call.1} parent=11 // pred_fallthru
          _
        // Predicated region
        $region45: #{tpu_custom_call.1} parent=11 // pred_check
          %p321 = pneg %p235
        $region46: #{tpu_custom_call.1} parent=11 // pred_check_branch
          %323 = sbr.rel (%p321) target = $region48
        $region47: #{tpu_custom_call.1} parent=11 // pred_region
          _
        $region48: #{tpu_custom_call.1} parent=11 // pred_fallthru
          _
        // Predicated region
        $region49: #{tpu_custom_call.1} parent=11 // pred_check
          %p324 = pneg %p256
        $region50: #{tpu_custom_call.1} parent=11 // pred_check_branch
          %326 = sbr.rel (%p324) target = $region52
        $region51: #{tpu_custom_call.1} parent=11 // pred_region
          _
        $region52: #{tpu_custom_call.1} parent=11 // pred_fallthru
          _
      $region12: #{tpu_custom_call.1} parent=5 // pred_fallthru
        _
      %p327 = scmp.lt.s32.totalorder %s20, 2
      // Predicated region
      $region53: #{tpu_custom_call.1} parent=5 // pred_check
        %p328 = pneg %p327
      $region54: #{tpu_custom_call.1} parent=5 // pred_check_branch
        %330 = sbr.rel (%p328) target = $region56
      $region55: #{tpu_custom_call.1} parent=5 // pred_region
        // Predicated region
        $region57: #{tpu_custom_call.1} parent=55 // pred_check
          %p331 = pneg %p40
        $region58: #{tpu_custom_call.1} parent=55 // pred_check_branch
          %333 = sbr.rel (%p331) target = $region60
        $region59: #{tpu_custom_call.1} parent=55 // pred_region
          %s334 = smul.u32 2, %s20
          %p335 = scmp.lt.s32.totalorder %s334, 3
          %s336 = scalar_select %p335, %s334, 3
          %s337 = smul.addr %s336, 4
          %s338 = scalar_lea.vmem %s0, %s337
          %s339 = smul.u32 2, %s20
        $region60: #{tpu_custom_call.1} parent=55 // pred_fallthru
          _
      $region56: #{tpu_custom_call.1} parent=5 // pred_fallthru
        _
      %p340 = scmp.le.s32.totalorder 1, %s20
      %p341 = scmp.lt.s32.totalorder %s20, 3
      %p342 = pnand %p340, %p341
      %p343 = pneg %p342
      // Predicated region
      $region61: #{tpu_custom_call.1} parent=5 // pred_check
        _
      $region62: #{tpu_custom_call.1} parent=5 // pred_check_branch
        %345 = sbr.rel (%p342) target = $region64
      $region63: #{tpu_custom_call.1} parent=5 // pred_region
        %s346 = ssub.s32 %s20, 1
        %s347 = smul.u32 2, %s25
        %p348 = scmp.lt.s32.totalorder %s347, 3
        %s349 = scalar_select %p348, %s347, 3
        %s350 = smul.addr %s349, 4
        %s351 = scalar_lea.vmem %s0, %s350
        %p352 = pneg %p46
        %p353 = pneg %p43
        %p354 = pneg %p67
        %p355 = pneg %p64
        %p356 = pneg %p88
        %p357 = pneg %p85
        %p358 = pneg %p109
        %p359 = pneg %p106
        %p360 = pneg %p130
        %p361 = pneg %p127
        %p362 = pneg %p151
        %p363 = pneg %p148
        %p364 = pneg %p172
        %p365 = pneg %p169
        %p366 = pneg %p193
        %p367 = pneg %p190
        %p368 = pneg %p214
        %p369 = pneg %p211
        %p370 = pneg %p235
        %p371 = pneg %p232
        %p372 = pneg %p256
        %p373 = pneg %p253
        %p374 = pneg %p282
        %p375 = pneg %p279
        %s376 = sand.u32 %s269, 1
        %s377 = scalar_lea.sflag [#allocation5], %s376
        %s378 = sand.u32 %s269, 1
        %s379 = smul.addr %s378, 8
        %s380 = scalar_lea.vmem [#allocation4], %s379
        %s381 = smul.u32 2, %s25
        %p382 = scmp.lt.s32.totalorder %s381, 3
        %s383 = scalar_select %p382, %s381, 3
        %s384 = smul.addr %s383, 4
        %s385 = scalar_lea.vmem %s0, %s384
        %s386 = smul.u32 2, %s25
        %s387 = smul.u32 2, %s25
        %v388 = vld [vmem:[%s1] sm:$0xff]
        %v389 = vld [vmem:[%s1 + $0x8] sm:$0xff]
        %v390 = vld [vmem:[%s2] sm:$0xf]
        %v391 = vld [vmem:[%s3] sm:$0xf]
        %v392 = vld [vmem:[%s4] sm:$0xff]
        %v393 = vld [vmem:[%s4 + $0x8] sm:$0xff]
        %v394 = vld [vmem:[%s4 + $0x10] sm:$0xff]
        %v395 = vld [vmem:[%s4 + $0x18] sm:$0xff]
        %v396 = vld [vmem:[%s4 + $0x20] sm:$0xff]
        %v397 = vld [vmem:[%s4 + $0x28] sm:$0xff]
        %v398 = vld [vmem:[%s4 + $0x30] sm:$0x1]
        %v399 = vld [vmem:[%s7] sm:$0xff]
        %v400 = vld [vmem:[%s7 + $0x8] sm:$0xff]
        %v401 = vld [vmem:[%s7 + $0x10] sm:$0x1]
        %v402 = vld [vmem:[%s9] sm:$0xff]
        %v403 = vld [vmem:[%s9 + $0x8] sm:$0xff]
        %v404 = vld [vmem:[%s9 + $0x10] sm:$0xff]
        %v405 = vld [vmem:[%s9 + $0x18] sm:$0xff]
        %v406 = vld [vmem:[%s10] sm:$0xf]
        %v407 = vld [vmem:[%s6] sm:$0xf]
        %409 = vset.pattern.permute.xlu0 0
        %410 = vperm.xlu0 %409, %v407
        %v411 = vpop.permute.xlu0 %410
        %413 = vset.pattern.permute.xlu0 1
        %414 = vperm.xlu0 %413, %v407
        %v415 = vpop.permute.xlu0 %414
        %417 = vset.pattern.permute.xlu0 2
        %418 = vperm.xlu0 %417, %v407
        %v419 = vpop.permute.xlu0 %418
        %v421 = vld [vmem:[%s5] sm:$0xff]
        %v422 = vld [vmem:[%s5 + $0x8] sm:$0xff]
        %v423 = vld [vmem:[%s5 + $0x10] sm:$0xff]
        %v424 = vld [vmem:[%s5 + $0x18] sm:$0xff]
        %v425 = vld [vmem:[%s5 + $0x20] sm:$0xff]
        %v426 = vld [vmem:[%s5 + $0x28] sm:$0xff]
        %v427 = vld [vmem:[%s5 + $0x30] sm:$0x1]
        %429 = vset.pattern.permute.xlu0 0
        %430 = vperm.xlu0 %429, %v421
        %v431 = vpop.permute.xlu0 %430
        %434 = vset.pattern.permute.xlu0 0
        %435 = vperm.xlu0 %434, %v422
        %v436 = vpop.permute.xlu0 %435
        %439 = vset.pattern.permute.xlu0 0
        %440 = vperm.xlu0 %439, %v423
        %v441 = vpop.permute.xlu0 %440
        %444 = vset.pattern.permute.xlu0 0
        %445 = vperm.xlu0 %444, %v424
        %v446 = vpop.permute.xlu0 %445
        %449 = vset.pattern.permute.xlu0 0
        %450 = vperm.xlu0 %449, %v425
        %v451 = vpop.permute.xlu0 %450
        %454 = vset.pattern.permute.xlu0 0
        %455 = vperm.xlu0 %454, %v426
        %v456 = vpop.permute.xlu0 %455
        %459 = vset.pattern.permute.xlu0 0
        %460 = vperm.xlu0 %459, %v427
        %v461 = vpop.permute.xlu0 %460
        %v463 = vld [vmem:[%s8] sm:$0x1]
        %v465 = vperm.slane %v463, 0
        %v467 = vld [vmem:[%s385] sm:$0xff]
        %469 = vst [vmem:[#allocation1] ss:$2 sm:$0xff] %v467
        %v470 = vld.sshfl [vmem:[#allocation1] sm:$0xff pattern:$0x75316420]
        %v471 = vld.sshfl [vmem:[#allocation1 + $0x8] sm:$0xff pattern:$0x75316420]
        %vm472 = vcmask 31744
        %v474 = vsel %vm472, %v390, 0
        %vm476 = vcmask 1043456
        %v477 = vsel %vm476, %v470, 0
        %v479 = vsel %vm476, %v471, 0
        %481 = vmatpush.msra.mxu0 0.0
        %482 = vmatpush.msra.mxu0 0.0
        %483 = vmatpush.msra.mxu0 0.0
        %484 = vmatpush.msra.mxu0 0.0
        %485 = vmatpush.msra.mxu0 0.0
        %486 = vmatpush.msra.mxu0 0.0
        %487 = vmatpush.msra.mxu0 0.0
        %488 = vmatpush.msra.mxu0 0.0
        %489 = vmatpush.msra.mxu0 0.0
        %490 = vmatpush.msra.mxu0 0.0
        %491 = vmatpush.msra.mxu0 0.0
        %492 = vmatpush.msra.mxu0 0.0
        %493 = vmatpush.msra.mxu0 0.0
        %494 = vmatpush.msra.mxu0 0.0
        %495 = vmatpush.msra.mxu0 0.0
        %496 = vmatpush.msra.mxu0 %v477
        %497 = vmatmul.f32.gmra.mxu0 %v474
        %v498 = vpop.f32.mrf.mxu0
        %v499 = vadd.f32 %v411, %v498
        %500 = vdwg.mxu0
        %501 = vmatpush.msra.mxu0 0.0
        %502 = vmatpush.msra.mxu0 0.0
        %503 = vmatpush.msra.mxu0 0.0
        %504 = vmatpush.msra.mxu0 0.0
        %505 = vmatpush.msra.mxu0 0.0
        %506 = vmatpush.msra.mxu0 0.0
        %507 = vmatpush.msra.mxu0 0.0
        %508 = vmatpush.msra.mxu0 0.0
        %509 = vmatpush.msra.mxu0 0.0
        %510 = vmatpush.msra.mxu0 0.0
        %511 = vmatpush.msra.mxu0 0.0
        %512 = vmatpush.msra.mxu0 0.0
        %513 = vmatpush.msra.mxu0 0.0
        %514 = vmatpush.msra.mxu0 0.0
        %515 = vmatpush.msra.mxu0 0.0
        %516 = vmatpush.msra.mxu0 %v479
        %517 = vmatmul.f32.gmra.mxu0 %v474
        %v518 = vpop.f32.mrf.mxu0
        %v519 = vadd.f32 %v411, %v518
        %520 = vdwg.mxu0
        %v522 = vsel %vm472, %v388, 0
        %v525 = vsel %vm472, %v389, 0
        %v528 = vsel %vm476, %v499, 0
        %v531 = vsel %vm476, %v519, 0
        %533 = vmatpush.msra.mxu0 0.0
        %534 = vmatpush.msra.mxu0 0.0
        %535 = vmatpush.msra.mxu0 0.0
        %536 = vmatpush.msra.mxu0 0.0
        %537 = vmatpush.msra.mxu0 0.0
        %538 = vmatpush.msra.mxu0 0.0
        %539 = vmatpush.msra.mxu0 0.0
        %540 = vmatpush.msra.mxu0 0.0
        %541 = vmatpush.msra.mxu0 0.0
        %542 = vmatpush.msra.mxu0 0.0
        %543 = vmatpush.msra.mxu0 0.0
        %544 = vmatpush.msra.mxu0 0.0
        %545 = vmatpush.msra.mxu0 0.0
        %546 = vmatpush.msra.mxu0 0.0
        %547 = vmatpush.msra.mxu0 0.0
        %548 = vmatpush.msra.mxu0 %v528
        %549 = vmatmul.f32.gmra.mxu0 %v522
        %v550 = vpop.f32.mrf.mxu0
        %v551 = vadd.f32 0.0, %v550
        %552 = vmatmul.f32.gmra.mxu0 %v525
        %v553 = vpop.f32.mrf.mxu0
        %v554 = vadd.f32 0.0, %v553
        %555 = vdwg.mxu0
        %556 = vmatpush.msra.mxu0 0.0
        %557 = vmatpush.msra.mxu0 0.0
        %558 = vmatpush.msra.mxu0 0.0
        %559 = vmatpush.msra.mxu0 0.0
        %560 = vmatpush.msra.mxu0 0.0
        %561 = vmatpush.msra.mxu0 0.0
        %562 = vmatpush.msra.mxu0 0.0
        %563 = vmatpush.msra.mxu0 0.0
        %564 = vmatpush.msra.mxu0 0.0
        %565 = vmatpush.msra.mxu0 0.0
        %566 = vmatpush.msra.mxu0 0.0
        %567 = vmatpush.msra.mxu0 0.0
        %568 = vmatpush.msra.mxu0 0.0
        %569 = vmatpush.msra.mxu0 0.0
        %570 = vmatpush.msra.mxu0 0.0
        %571 = vmatpush.msra.mxu0 %v531
        %572 = vmatmul.f32.gmra.mxu0 %v522
        %v573 = vpop.f32.mrf.mxu0
        %v574 = vadd.f32 0.0, %v573
        %575 = vmatmul.f32.gmra.mxu0 %v525
        %v576 = vpop.f32.mrf.mxu0
        %v577 = vadd.f32 0.0, %v576
        %578 = vdwg.mxu0
        %v579 = vmax.f32 %v551, %v554
        %v580 = vrot.slane %v579, 4
        %v581 = vmax.f32 %v579, %v580
        %v582 = vrot.slane %v581, 2
        %v583 = vmax.f32 %v581, %v582
        %v584 = vrot.slane %v583, 1
        %v585 = vmax.f32 %v583, %v584
        %v586 = vmax.f32 %v574, %v577
        %v587 = vrot.slane %v586, 4
        %v588 = vmax.f32 %v586, %v587
        %v589 = vrot.slane %v588, 2
        %v590 = vmax.f32 %v588, %v589
        %v591 = vrot.slane %v590, 1
        %v592 = vmax.f32 %v590, %v591
        %v593 = vsub.f32 %v551, %v585
        %v594 = vsub.f32 %v574, %v592
        %v595 = vsub.f32 %v554, %v585
        %v596 = vsub.f32 %v577, %v592
        %v597 = vmul.f32 %v593, 1.442695
        %v598 = vpow.pop %v597
        %v599 = vmul.f32 %v594, 1.442695
        %v600 = vpow.pop %v599
        %v601 = vmul.f32 %v595, 1.442695
        %v602 = vpow.pop %v601
        %v603 = vmul.f32 %v596, 1.442695
        %v604 = vpow.pop %v603
        %v605 = vadd.f32 %v598, %v602
        %v606 = vrot.slane %v605, 4
        %v607 = vadd.f32 %v605, %v606
        %v608 = vrot.slane %v607, 2
        %v609 = vadd.f32 %v607, %v608
        %v610 = vrot.slane %v609, 1
        %v611 = vadd.f32 %v609, %v610
        %v612 = vadd.f32 %v600, %v604
        %v613 = vrot.slane %v612, 4
        %v614 = vadd.f32 %v612, %v613
        %v615 = vrot.slane %v614, 2
        %v616 = vadd.f32 %v614, %v615
        %v617 = vrot.slane %v616, 1
        %v618 = vadd.f32 %v616, %v617
        %v619 = vrcp.pop %v611
        %v620 = vrcp.pop %v618
        %v621 = vmul.f32 %v598, %v619
        %v622 = vmul.f32 %v600, %v620
        %v623 = vmul.f32 %v602, %v619
        %v624 = vmul.f32 %v604, %v620
        %v625 = vadd.f32 %v621, %v622
        %626 = vadd.xlane.f32.xlu0 %v625
        %v627 = vpop.xlane.xlu0 %626
        %v628 = vadd.f32 %v623, %v624
        %629 = vadd.xlane.f32.xlu0 %v628
        %v630 = vpop.xlane.xlu0 %629
        %v631 = vadd.f32 %v627, 1e-06
        %v632 = vadd.f32 %v630, 1e-06
        %v633 = vrcp.pop %v631
        %v634 = vrcp.pop %v632
        %v635 = vmul.f32 %v621, %v633
        %v636 = vmul.f32 %v622, %v633
        %v637 = vmul.f32 %v623, %v634
        %v638 = vmul.f32 %v624, %v634
        %639 = vmatpush.xpose.msra.mxu0 0.0
        %640 = vmatpush.xpose.msra.mxu0 0.0
        %641 = vmatpush.xpose.msra.mxu0 0.0
        %642 = vmatpush.xpose.msra.mxu0 0.0
        %643 = vmatpush.xpose.msra.mxu0 0.0
        %644 = vmatpush.xpose.msra.mxu0 0.0
        %645 = vmatpush.xpose.msra.mxu0 0.0
        %646 = vmatpush.xpose.msra.mxu0 0.0
        %647 = vmatpush.xpose.msra.mxu0 0.0
        %648 = vmatpush.xpose.msra.mxu0 0.0
        %649 = vmatpush.xpose.msra.mxu0 0.0
        %650 = vmatpush.xpose.msra.mxu0 0.0
        %651 = vmatpush.xpose.msra.mxu0 0.0
        %652 = vmatpush.xpose.msra.mxu0 0.0
        %653 = vmatpush.xpose.msra.mxu0 %v637
        %654 = vmatpush.xpose.msra.mxu0 %v635
        %655 = vmatmul.f32.gmra.mxu0 %v499
        %v656 = vpop.f32.mrf.mxu0
        %v657 = vadd.f32 0.0, %v656
        %658 = vdwg.mxu0
        %659 = vmatpush.xpose.msra.mxu0 0.0
        %660 = vmatpush.xpose.msra.mxu0 0.0
        %661 = vmatpush.xpose.msra.mxu0 0.0
        %662 = vmatpush.xpose.msra.mxu0 0.0
        %663 = vmatpush.xpose.msra.mxu0 0.0
        %664 = vmatpush.xpose.msra.mxu0 0.0
        %665 = vmatpush.xpose.msra.mxu0 0.0
        %666 = vmatpush.xpose.msra.mxu0 0.0
        %667 = vmatpush.xpose.msra.mxu0 0.0
        %668 = vmatpush.xpose.msra.mxu0 0.0
        %669 = vmatpush.xpose.msra.mxu0 0.0
        %670 = vmatpush.xpose.msra.mxu0 0.0
        %671 = vmatpush.xpose.msra.mxu0 0.0
        %672 = vmatpush.xpose.msra.mxu0 0.0
        %673 = vmatpush.xpose.msra.mxu0 %v638
        %674 = vmatpush.xpose.msra.mxu0 %v636
        %675 = vmatmul.f32.gmra.mxu0 %v519
        %v676 = vpop.f32.mrf.mxu0
        %v677 = vadd.f32 %v657, %v676
        %678 = vdwg.mxu0
        %v679 = vmul.f32 %v677, %v677
        %vm680 = vcmask 125952
        %v681 = vsel %vm680, %v679, 0.0
        %v682 = vrot.slane %v681, 4
        %v683 = vadd.f32 %v681, %v682
        %v684 = vrot.slane %v683, 2
        %v685 = vadd.f32 %v683, %v684
        %v686 = vrot.slane %v685, 1
        %v687 = vadd.f32 %v685, %v686
        %v688 = vadd.f32 %v687, 1e-12
        %v689 = vrsqrt.pop %v688
        %v690 = vmul.f32 %v689, %v688
        %v691 = vmul.f32 %v690, %v689
        %v692 = vmul.f32 0.5, %v691
        %v693 = vsub.f32 1.5, %v692
        %v694 = vmul.f32 %v689, %v693
        %vm695 = vweird.f32 %v688
        %vm696 = vweird.f32 %v689
        %vm697 = vmor %vm695, %vm696
        %v698 = vsel %vm697, %v689, %v694
        %v699 = vmul.f32 %v677, %v698
        %vm700 = vcmask 130048
        %v702 = vsel %vm700, %v699, 0
        %704 = vmatpush.msra.mxu0 0.0
        %705 = vmatpush.msra.mxu0 0.0
        %706 = vmatpush.msra.mxu0 0.0
        %707 = vmatpush.msra.mxu0 0.0
        %708 = vmatpush.msra.mxu0 0.0
        %709 = vmatpush.msra.mxu0 0.0
        %710 = vmatpush.msra.mxu0 0.0
        %711 = vmatpush.msra.mxu0 0.0
        %712 = vmatpush.msra.mxu0 0.0
        %713 = vmatpush.msra.mxu0 0.0
        %714 = vmatpush.msra.mxu0 0.0
        %715 = vmatpush.msra.mxu0 0.0
        %716 = vmatpush.msra.mxu0 0.0
        %717 = vmatpush.msra.mxu0 0.0
        %718 = vmatpush.msra.mxu0 %v623
        %719 = vmatpush.msra.mxu0 %v621
        %720 = vmatmul.f32.gmra.mxu0 %v702
        %v721 = vpop.f32.mrf.mxu0
        %v722 = vadd.f32 0.0, %v721
        %723 = vdwg.mxu0
        %724 = vmatpush.msra.mxu0 0.0
        %725 = vmatpush.msra.mxu0 0.0
        %726 = vmatpush.msra.mxu0 0.0
        %727 = vmatpush.msra.mxu0 0.0
        %728 = vmatpush.msra.mxu0 0.0
        %729 = vmatpush.msra.mxu0 0.0
        %730 = vmatpush.msra.mxu0 0.0
        %731 = vmatpush.msra.mxu0 0.0
        %732 = vmatpush.msra.mxu0 0.0
        %733 = vmatpush.msra.mxu0 0.0
        %734 = vmatpush.msra.mxu0 0.0
        %735 = vmatpush.msra.mxu0 0.0
        %736 = vmatpush.msra.mxu0 0.0
        %737 = vmatpush.msra.mxu0 0.0
        %738 = vmatpush.msra.mxu0 %v624
        %739 = vmatpush.msra.mxu0 %v622
        %740 = vmatmul.f32.gmra.mxu0 %v702
        %v741 = vpop.f32.mrf.mxu0
        %v742 = vadd.f32 0.0, %v741
        %743 = vdwg.mxu0
        %v744 = vmax.f32 %v722, 0.0
        %v745 = vmax.f32 %v742, 0.0
        %v748 = vrot.slane %v745, 4
        %v749 = vsel %vm476, %v744, %v748
        %751 = vst [vmem:[#allocation2] sm:$0xff] %v749
        %v752 = vld [vmem:[#allocation2] sm:$0xff]
        %754 = vst [vmem:[#allocation1] ss:$2 sm:$0xff] %v752
        %v755 = vld.sshfl [vmem:[#allocation1] sm:$0xff pattern:$0x75316420]
        %v756 = vld.sshfl [vmem:[#allocation1 + $0x8] sm:$0xff pattern:$0x75316420]
        %v758 = vsel %vm472, %v391, 0
        %v760 = vsel %vm476, %v755, 0
        %v762 = vsel %vm476, %v756, 0
        %764 = vmatpush.msra.mxu0 0.0
        %765 = vmatpush.msra.mxu0 0.0
        %766 = vmatpush.msra.mxu0 0.0
        %767 = vmatpush.msra.mxu0 0.0
        %768 = vmatpush.msra.mxu0 0.0
        %769 = vmatpush.msra.mxu0 0.0
        %770 = vmatpush.msra.mxu0 0.0
        %771 = vmatpush.msra.mxu0 0.0
        %772 = vmatpush.msra.mxu0 0.0
        %773 = vmatpush.msra.mxu0 0.0
        %774 = vmatpush.msra.mxu0 0.0
        %775 = vmatpush.msra.mxu0 0.0
        %776 = vmatpush.msra.mxu0 0.0
        %777 = vmatpush.msra.mxu0 0.0
        %778 = vmatpush.msra.mxu0 0.0
        %779 = vmatpush.msra.mxu0 %v760
        %780 = vmatmul.f32.gmra.mxu0 %v758
        %v781 = vpop.f32.mrf.mxu0
        %v782 = vadd.f32 %v415, %v781
        %783 = vdwg.mxu0
        %784 = vmatpush.msra.mxu0 0.0
        %785 = vmatpush.msra.mxu0 0.0
        %786 = vmatpush.msra.mxu0 0.0
        %787 = vmatpush.msra.mxu0 0.0
        %788 = vmatpush.msra.mxu0 0.0
        %789 = vmatpush.msra.mxu0 0.0
        %790 = vmatpush.msra.mxu0 0.0
        %791 = vmatpush.msra.mxu0 0.0
        %792 = vmatpush.msra.mxu0 0.0
        %793 = vmatpush.msra.mxu0 0.0
        %794 = vmatpush.msra.mxu0 0.0
        %795 = vmatpush.msra.mxu0 0.0
        %796 = vmatpush.msra.mxu0 0.0
        %797 = vmatpush.msra.mxu0 0.0
        %798 = vmatpush.msra.mxu0 0.0
        %799 = vmatpush.msra.mxu0 %v762
        %800 = vmatmul.f32.gmra.mxu0 %v758
        %v801 = vpop.f32.mrf.mxu0
        %v802 = vadd.f32 %v415, %v801
        %803 = vdwg.mxu0
        %804 = vst [vmem:[#allocation1] ss:$2 sm:$0xff] %v467
        %v805 = vld.sshfl [vmem:[#allocation1] sm:$0xff pattern:$0x75316420]
        %v806 = vld.sshfl [vmem:[#allocation1 + $0x8] sm:$0xff pattern:$0x75316420]
        %v809 = vadd.f32 %v782, %v805
        %v810 = vadd.f32 %v802, %v806
        %v811 = vmax.f32 %v809, 0.0
        %v812 = vmax.f32 %v810, 0.0
        %v814 = vsel %vm472, %v392, 0
        %v817 = vsel %vm472, %v393, 0
        %v820 = vsel %vm472, %v394, 0
        %v823 = vsel %vm472, %v395, 0
        %v826 = vsel %vm472, %v396, 0
        %v829 = vsel %vm472, %v397, 0
        %v832 = vsel %vm472, %v398, 0
        %v835 = vsel %vm476, %v811, 0
        %v838 = vsel %vm476, %v812, 0
        %840 = vmatpush.msra.mxu0 0.0
        %841 = vmatpush.msra.mxu0 0.0
        %842 = vmatpush.msra.mxu0 0.0
        %843 = vmatpush.msra.mxu0 0.0
        %844 = vmatpush.msra.mxu0 0.0
        %845 = vmatpush.msra.mxu0 0.0
        %846 = vmatpush.msra.mxu0 0.0
        %847 = vmatpush.msra.mxu0 0.0
        %848 = vmatpush.msra.mxu0 0.0
        %849 = vmatpush.msra.mxu0 0.0
        %850 = vmatpush.msra.mxu0 0.0
        %851 = vmatpush.msra.mxu0 0.0
        %852 = vmatpush.msra.mxu0 0.0
        %853 = vmatpush.msra.mxu0 0.0
        %854 = vmatpush.msra.mxu0 0.0
        %855 = vmatpush.msra.mxu0 %v835
        %856 = vmatmul.f32.gmra.mxu0 %v814
        %v857 = vpop.f32.mrf.mxu0
        %v858 = vadd.f32 %v431, %v857
        %859 = vmatmul.f32.gmra.mxu0 %v817
        %v860 = vpop.f32.mrf.mxu0
        %v861 = vadd.f32 %v436, %v860
        %862 = vmatmul.f32.gmra.mxu0 %v820
        %v863 = vpop.f32.mrf.mxu0
        %v864 = vadd.f32 %v441, %v863
        %865 = vmatmul.f32.gmra.mxu0 %v823
        %v866 = vpop.f32.mrf.mxu0
        %v867 = vadd.f32 %v446, %v866
        %868 = vmatmul.f32.gmra.mxu0 %v826
        %v869 = vpop.f32.mrf.mxu0
        %v870 = vadd.f32 %v451, %v869
        %871 = vmatmul.f32.gmra.mxu0 %v829
        %v872 = vpop.f32.mrf.mxu0
        %v873 = vadd.f32 %v456, %v872
        %874 = vmatmul.f32.gmra.mxu0 %v832
        %v875 = vpop.f32.mrf.mxu0
        %v876 = vadd.f32 %v461, %v875
        %877 = vdwg.mxu0
        %878 = vmatpush.msra.mxu0 0.0
        %879 = vmatpush.msra.mxu0 0.0
        %880 = vmatpush.msra.mxu0 0.0
        %881 = vmatpush.msra.mxu0 0.0
        %882 = vmatpush.msra.mxu0 0.0
        %883 = vmatpush.msra.mxu0 0.0
        %884 = vmatpush.msra.mxu0 0.0
        %885 = vmatpush.msra.mxu0 0.0
        %886 = vmatpush.msra.mxu0 0.0
        %887 = vmatpush.msra.mxu0 0.0
        %888 = vmatpush.msra.mxu0 0.0
        %889 = vmatpush.msra.mxu0 0.0
        %890 = vmatpush.msra.mxu0 0.0
        %891 = vmatpush.msra.mxu0 0.0
        %892 = vmatpush.msra.mxu0 0.0
        %893 = vmatpush.msra.mxu0 %v838
        %894 = vmatmul.f32.gmra.mxu0 %v814
        %v895 = vpop.f32.mrf.mxu0
        %v896 = vadd.f32 %v431, %v895
        %897 = vmatmul.f32.gmra.mxu0 %v817
        %v898 = vpop.f32.mrf.mxu0
        %v899 = vadd.f32 %v436, %v898
        %900 = vmatmul.f32.gmra.mxu0 %v820
        %v901 = vpop.f32.mrf.mxu0
        %v902 = vadd.f32 %v441, %v901
        %903 = vmatmul.f32.gmra.mxu0 %v823
        %v904 = vpop.f32.mrf.mxu0
        %v905 = vadd.f32 %v446, %v904
        %906 = vmatmul.f32.gmra.mxu0 %v826
        %v907 = vpop.f32.mrf.mxu0
        %v908 = vadd.f32 %v451, %v907
        %909 = vmatmul.f32.gmra.mxu0 %v829
        %v910 = vpop.f32.mrf.mxu0
        %v911 = vadd.f32 %v456, %v910
        %912 = vmatmul.f32.gmra.mxu0 %v832
        %v913 = vpop.f32.mrf.mxu0
        %v914 = vadd.f32 %v461, %v913
        %915 = vdwg.mxu0
        %916 = vmatpush.xpose.msra.mxu0 0.0
        %917 = vmatpush.xpose.msra.mxu0 0.0
        %918 = vmatpush.xpose.msra.mxu0 0.0
        %919 = vmatpush.xpose.msra.mxu0 0.0
        %920 = vmatpush.xpose.msra.mxu0 0.0
        %921 = vmatpush.xpose.msra.mxu0 0.0
        %922 = vmatpush.xpose.msra.mxu0 0.0
        %923 = vmatpush.xpose.msra.mxu0 0.0
        %924 = vmatpush.xpose.msra.mxu0 0.0
        %925 = vmatpush.xpose.msra.mxu0 0.0
        %926 = vmatpush.xpose.msra.mxu0 0.0
        %927 = vmatpush.xpose.msra.mxu0 0.0
        %928 = vmatpush.xpose.msra.mxu0 0.0
        %929 = vmatpush.xpose.msra.mxu0 %v876
        %930 = vmatpush.xpose.msra.mxu0 %v873
        %931 = vmatpush.xpose.msra.mxu0 %v870
        %932 = vmatmul.f32.gmra.mxu0 %v858
        %v933 = vpop.f32.mrf.mxu0
        %v934 = vadd.f32 0.0, %v933
        %935 = vmatmul.f32.gmra.mxu0 %v861
        %v936 = vpop.f32.mrf.mxu0
        %v937 = vadd.f32 0.0, %v936
        %938 = vmatmul.f32.gmra.mxu0 %v864
        %v939 = vpop.f32.mrf.mxu0
        %v940 = vadd.f32 0.0, %v939
        %941 = vmatmul.f32.gmra.mxu0 %v867
        %v942 = vpop.f32.mrf.mxu0
        %v943 = vadd.f32 0.0, %v942
        %944 = vdwg.mxu0
        %945 = vmatpush.xpose.msra.mxu0 0.0
        %946 = vmatpush.xpose.msra.mxu0 0.0
        %947 = vmatpush.xpose.msra.mxu0 0.0
        %948 = vmatpush.xpose.msra.mxu0 0.0
        %949 = vmatpush.xpose.msra.mxu0 0.0
        %950 = vmatpush.xpose.msra.mxu0 0.0
        %951 = vmatpush.xpose.msra.mxu0 0.0
        %952 = vmatpush.xpose.msra.mxu0 0.0
        %953 = vmatpush.xpose.msra.mxu0 0.0
        %954 = vmatpush.xpose.msra.mxu0 0.0
        %955 = vmatpush.xpose.msra.mxu0 0.0
        %956 = vmatpush.xpose.msra.mxu0 0.0
        %957 = vmatpush.xpose.msra.mxu0 0.0
        %958 = vmatpush.xpose.msra.mxu0 %v914
        %959 = vmatpush.xpose.msra.mxu0 %v911
        %960 = vmatpush.xpose.msra.mxu0 %v908
        %961 = vmatmul.f32.gmra.mxu0 %v896
        %v962 = vpop.f32.mrf.mxu0
        %v963 = vadd.f32 %v934, %v962
        %964 = vmatmul.f32.gmra.mxu0 %v899
        %v965 = vpop.f32.mrf.mxu0
        %v966 = vadd.f32 %v937, %v965
        %967 = vmatmul.f32.gmra.mxu0 %v902
        %v968 = vpop.f32.mrf.mxu0
        %v969 = vadd.f32 %v940, %v968
        %970 = vmatmul.f32.gmra.mxu0 %v905
        %v971 = vpop.f32.mrf.mxu0
        %v972 = vadd.f32 %v943, %v971
        %973 = vdwg.mxu0
        %vm974 = vcmask 138240
        %v976 = vsel %vm974, %v963, 0
        %v979 = vsel %vm974, %v966, 0
        %v982 = vsel %vm974, %v969, 0
        %v985 = vsel %vm974, %v972, 0
        %vm987 = vcmask 1040384
        %v989 = vsel %vm987, %v401, 0
        %991 = vmatpush.msra.mxu0 0.0
        %992 = vmatpush.msra.mxu0 0.0
        %993 = vmatpush.msra.mxu0 0.0
        %994 = vmatpush.msra.mxu0 0.0
        %995 = vmatpush.msra.mxu0 0.0
        %996 = vmatpush.msra.mxu0 0.0
        %997 = vmatpush.msra.mxu0 0.0
        %998 = vmatpush.msra.mxu0 0.0
        %999 = vmatpush.msra.mxu0 0.0
        %1000 = vmatpush.msra.mxu0 0.0
        %1001 = vmatpush.msra.mxu0 0.0
        %1002 = vmatpush.msra.mxu0 0.0
        %1003 = vmatpush.msra.mxu0 0.0
        %1004 = vmatpush.msra.mxu0 %v989
        %1005 = vmatpush.msra.mxu0 %v400
        %1006 = vmatpush.msra.mxu0 %v399
        %1007 = vmatmul.f32.gmra.mxu0 %v976
        %v1008 = vpop.f32.mrf.mxu0
        %v1009 = vadd.f32 %v465, %v1008
        %1010 = vmatmul.f32.gmra.mxu0 %v979
        %v1011 = vpop.f32.mrf.mxu0
        %v1012 = vadd.f32 %v465, %v1011
        %1013 = vmatmul.f32.gmra.mxu0 %v982
        %v1014 = vpop.f32.mrf.mxu0
        %v1015 = vadd.f32 %v465, %v1014
        %1016 = vmatmul.f32.gmra.mxu0 %v985
        %v1017 = vpop.f32.mrf.mxu0
        %v1018 = vadd.f32 %v465, %v1017
        %1019 = vdwg.mxu0
        %v1020 = vadd.f32 %v1009, %v963
        %v1021 = vadd.f32 %v1012, %v966
        %v1022 = vadd.f32 %v1015, %v969
        %v1023 = vadd.f32 %v1018, %v972
        %v1024 = vmax.f32 %v1020, 0.0
        %v1025 = vmax.f32 %v1021, 0.0
        %v1026 = vmax.f32 %v1022, 0.0
        %v1027 = vmax.f32 %v1023, 0.0
        %vm1028 = vcmask 261120
        %v1030 = vsel %vm1028, %v402, 0
        %v1033 = vsel %vm1028, %v403, 0
        %v1036 = vsel %vm1028, %v404, 0
        %v1039 = vsel %vm1028, %v405, 0
        %1041 = vmatpush.msra.mxu0 0.0
        %1042 = vmatpush.msra.mxu0 0.0
        %1043 = vmatpush.msra.mxu0 0.0
        %1044 = vmatpush.msra.mxu0 0.0
        %1045 = vmatpush.msra.mxu0 0.0
        %1046 = vmatpush.msra.mxu0 0.0
        %1047 = vmatpush.msra.mxu0 0.0
        %1048 = vmatpush.msra.mxu0 0.0
        %1049 = vmatpush.msra.mxu0 0.0
        %1050 = vmatpush.msra.mxu0 0.0
        %1051 = vmatpush.msra.mxu0 0.0
        %1052 = vmatpush.msra.mxu0 0.0
        %1053 = vmatpush.msra.mxu0 %v1027
        %1054 = vmatpush.msra.mxu0 %v1026
        %1055 = vmatpush.msra.mxu0 %v1025
        %1056 = vmatpush.msra.mxu0 %v1024
        %1057 = vmatmul.f32.gmra.mxu0 %v1030
        %v1058 = vpop.f32.mrf.mxu0
        %v1059 = vadd.f32 0.0, %v1058
        %1060 = vmatmul.f32.gmra.mxu0 %v1033
        %v1061 = vpop.f32.mrf.mxu0
        %v1062 = vadd.f32 0.0, %v1061
        %1063 = vmatmul.f32.gmra.mxu0 %v1036
        %v1064 = vpop.f32.mrf.mxu0
        %v1065 = vadd.f32 0.0, %v1064
        %1066 = vmatmul.f32.gmra.mxu0 %v1039
        %v1067 = vpop.f32.mrf.mxu0
        %v1068 = vadd.f32 0.0, %v1067
        %1069 = vdwg.mxu0
        %v1071 = vsel %vm700, %v1059, 0
        %v1074 = vsel %vm700, %v1062, 0
        %v1077 = vsel %vm700, %v1065, 0
        %v1080 = vsel %vm700, %v1068, 0
        %1082 = vmatpush.msra.mxu0 0.0
        %1083 = vmatpush.msra.mxu0 0.0
        %1084 = vmatpush.msra.mxu0 0.0
        %1085 = vmatpush.msra.mxu0 0.0
        %1086 = vmatpush.msra.mxu0 0.0
        %1087 = vmatpush.msra.mxu0 0.0
        %1088 = vmatpush.msra.mxu0 0.0
        %1089 = vmatpush.msra.mxu0 0.0
        %1090 = vmatpush.msra.mxu0 0.0
        %1091 = vmatpush.msra.mxu0 0.0
        %1092 = vmatpush.msra.mxu0 0.0
        %1093 = vmatpush.msra.mxu0 0.0
        %1094 = vmatpush.msra.mxu0 0.0
        %1095 = vmatpush.msra.mxu0 0.0
        %1096 = vmatpush.msra.mxu0 %v873
        %1097 = vmatpush.msra.mxu0 %v870
        %1098 = vmatmul.f32.gmra.mxu0 %v1071
        %v1099 = vpop.f32.mrf.mxu0
        %v1100 = vadd.f32 0.0, %v1099
        %1101 = vmatmul.f32.gmra.mxu0 %v1074
        %v1102 = vpop.f32.mrf.mxu0
        %v1103 = vadd.f32 0.0, %v1102
        %1104 = vmatmul.f32.gmra.mxu0 %v1077
        %v1105 = vpop.f32.mrf.mxu0
        %v1106 = vadd.f32 0.0, %v1105
        %1107 = vmatmul.f32.gmra.mxu0 %v1080
        %v1108 = vpop.f32.mrf.mxu0
        %v1109 = vadd.f32 0.0, %v1108
        %1110 = vdwg.mxu0
        %1111 = vmatpush.msra.mxu0 0.0
        %1112 = vmatpush.msra.mxu0 0.0
        %1113 = vmatpush.msra.mxu0 0.0
        %1114 = vmatpush.msra.mxu0 0.0
        %1115 = vmatpush.msra.mxu0 0.0
        %1116 = vmatpush.msra.mxu0 0.0
        %1117 = vmatpush.msra.mxu0 0.0
        %1118 = vmatpush.msra.mxu0 0.0
        %1119 = vmatpush.msra.mxu0 0.0
        %1120 = vmatpush.msra.mxu0 0.0
        %1121 = vmatpush.msra.mxu0 0.0
        %1122 = vmatpush.msra.mxu0 0.0
        %1123 = vmatpush.msra.mxu0 0.0
        %1124 = vmatpush.msra.mxu0 0.0
        %1125 = vmatpush.msra.mxu0 %v911
        %1126 = vmatpush.msra.mxu0 %v908
        %1127 = vmatmul.f32.gmra.mxu0 %v1071
        %v1128 = vpop.f32.mrf.mxu0
        %v1129 = vadd.f32 0.0, %v1128
        %1130 = vmatmul.f32.gmra.mxu0 %v1074
        %v1131 = vpop.f32.mrf.mxu0
        %v1132 = vadd.f32 0.0, %v1131
        %1133 = vmatmul.f32.gmra.mxu0 %v1077
        %v1134 = vpop.f32.mrf.mxu0
        %v1135 = vadd.f32 0.0, %v1134
        %1136 = vmatmul.f32.gmra.mxu0 %v1080
        %v1137 = vpop.f32.mrf.mxu0
        %v1138 = vadd.f32 0.0, %v1137
        %1139 = vdwg.mxu0
        %1140 = vst [vmem:[#allocation3] sm:$0xff] %v1100
        %1141 = vst [vmem:[#allocation3 + $0x8] sm:$0xff] %v1129
        %1142 = vst [vmem:[#allocation3 + $0x10] sm:$0xff] %v1103
        %1143 = vst [vmem:[#allocation3 + $0x18] sm:$0xff] %v1132
        %1144 = vst [vmem:[#allocation3 + $0x20] sm:$0xff] %v1106
        %1145 = vst [vmem:[#allocation3 + $0x28] sm:$0xff] %v1135
        %1146 = vst [vmem:[#allocation3 + $0x30] sm:$0xff] %v1109
        %1147 = vst [vmem:[#allocation3 + $0x38] sm:$0xff] %v1138
        %v1148 = vld [vmem:[#allocation3] sm:$0xff]
        %v1149 = vld [vmem:[#allocation3 + $0x8] sm:$0xff]
        %v1150 = vld [vmem:[#allocation3 + $0x10] sm:$0xff]
        %v1151 = vld [vmem:[#allocation3 + $0x18] sm:$0xff]
        %v1152 = vld [vmem:[#allocation3 + $0x20] sm:$0xff]
        %v1153 = vld [vmem:[#allocation3 + $0x28] sm:$0xff]
        %v1154 = vld [vmem:[#allocation3 + $0x30] sm:$0xff]
        %v1155 = vld [vmem:[#allocation3 + $0x38] sm:$0xff]
        %v1157 = vsel %vm1028, %v406, 0
        %1159 = vmatpush.msra.mxu0 0.0
        %1160 = vmatpush.msra.mxu0 0.0
        %1161 = vmatpush.msra.mxu0 0.0
        %1162 = vmatpush.msra.mxu0 0.0
        %1163 = vmatpush.msra.mxu0 0.0
        %1164 = vmatpush.msra.mxu0 0.0
        %1165 = vmatpush.msra.mxu0 0.0
        %1166 = vmatpush.msra.mxu0 0.0
        %1167 = vmatpush.msra.mxu0 0.0
        %1168 = vmatpush.msra.mxu0 0.0
        %1169 = vmatpush.msra.mxu0 0.0
        %1170 = vmatpush.msra.mxu0 0.0
        %1171 = vmatpush.msra.mxu0 %v1154
        %1172 = vmatpush.msra.mxu0 %v1152
        %1173 = vmatpush.msra.mxu0 %v1150
        %1174 = vmatpush.msra.mxu0 %v1148
        %1175 = vmatmul.f32.gmra.mxu0 %v1157
        %v1176 = vpop.f32.mrf.mxu0
        %v1177 = vadd.f32 %v419, %v1176
        %1178 = vdwg.mxu0
        %1179 = vmatpush.msra.mxu0 0.0
        %1180 = vmatpush.msra.mxu0 0.0
        %1181 = vmatpush.msra.mxu0 0.0
        %1182 = vmatpush.msra.mxu0 0.0
        %1183 = vmatpush.msra.mxu0 0.0
        %1184 = vmatpush.msra.mxu0 0.0
        %1185 = vmatpush.msra.mxu0 0.0
        %1186 = vmatpush.msra.mxu0 0.0
        %1187 = vmatpush.msra.mxu0 0.0
        %1188 = vmatpush.msra.mxu0 0.0
        %1189 = vmatpush.msra.mxu0 0.0
        %1190 = vmatpush.msra.mxu0 0.0
        %1191 = vmatpush.msra.mxu0 %v1155
        %1192 = vmatpush.msra.mxu0 %v1153
        %1193 = vmatpush.msra.mxu0 %v1151
        %1194 = vmatpush.msra.mxu0 %v1149
        %1195 = vmatmul.f32.gmra.mxu0 %v1157
        %v1196 = vpop.f32.mrf.mxu0
        %v1197 = vadd.f32 %v419, %v1196
        %1198 = vdwg.mxu0
        %v1199 = vadd.f32 %v811, %v1177
        %v1200 = vadd.f32 %v812, %v1197
        %v1202 = vsel %vm476, %v1199, 0
        %v1205 = vsel %vm476, %v1200, 0
        %1207 = vmatpush.msra.mxu0 0.0
        %1208 = vmatpush.msra.mxu0 0.0
        %1209 = vmatpush.msra.mxu0 0.0
        %1210 = vmatpush.msra.mxu0 0.0
        %1211 = vmatpush.msra.mxu0 0.0
        %1212 = vmatpush.msra.mxu0 0.0
        %1213 = vmatpush.msra.mxu0 0.0
        %1214 = vmatpush.msra.mxu0 0.0
        %1215 = vmatpush.msra.mxu0 0.0
        %1216 = vmatpush.msra.mxu0 0.0
        %1217 = vmatpush.msra.mxu0 0.0
        %1218 = vmatpush.msra.mxu0 0.0
        %1219 = vmatpush.msra.mxu0 0.0
        %1220 = vmatpush.msra.mxu0 0.0
        %1221 = vmatpush.msra.mxu0 0.0
        %1222 = vmatpush.msra.mxu0 %v1202
        %1223 = vmatmul.f32.gmra.mxu0 %v474
        %v1224 = vpop.f32.mrf.mxu0
        %v1225 = vadd.f32 %v411, %v1224
        %1226 = vdwg.mxu0
        %1227 = vmatpush.msra.mxu0 0.0
        %1228 = vmatpush.msra.mxu0 0.0
        %1229 = vmatpush.msra.mxu0 0.0
        %1230 = vmatpush.msra.mxu0 0.0
        %1231 = vmatpush.msra.mxu0 0.0
        %1232 = vmatpush.msra.mxu0 0.0
        %1233 = vmatpush.msra.mxu0 0.0
        %1234 = vmatpush.msra.mxu0 0.0
        %1235 = vmatpush.msra.mxu0 0.0
        %1236 = vmatpush.msra.mxu0 0.0
        %1237 = vmatpush.msra.mxu0 0.0
        %1238 = vmatpush.msra.mxu0 0.0
        %1239 = vmatpush.msra.mxu0 0.0
        %1240 = vmatpush.msra.mxu0 0.0
        %1241 = vmatpush.msra.mxu0 0.0
        %1242 = vmatpush.msra.mxu0 %v1205
        %1243 = vmatmul.f32.gmra.mxu0 %v474
        %v1244 = vpop.f32.mrf.mxu0
        %v1245 = vadd.f32 %v411, %v1244
        %1246 = vdwg.mxu0
        %v1248 = vsel %vm476, %v1225, 0
        %v1251 = vsel %vm476, %v1245, 0
        %1253 = vmatpush.msra.mxu0 0.0
        %1254 = vmatpush.msra.mxu0 0.0
        %1255 = vmatpush.msra.mxu0 0.0
        %1256 = vmatpush.msra.mxu0 0.0
        %1257 = vmatpush.msra.mxu0 0.0
        %1258 = vmatpush.msra.mxu0 0.0
        %1259 = vmatpush.msra.mxu0 0.0
        %1260 = vmatpush.msra.mxu0 0.0
        %1261 = vmatpush.msra.mxu0 0.0
        %1262 = vmatpush.msra.mxu0 0.0
        %1263 = vmatpush.msra.mxu0 0.0
        %1264 = vmatpush.msra.mxu0 0.0
        %1265 = vmatpush.msra.mxu0 0.0
        %1266 = vmatpush.msra.mxu0 0.0
        %1267 = vmatpush.msra.mxu0 0.0
        %1268 = vmatpush.msra.mxu0 %v1248
        %1269 = vmatmul.f32.gmra.mxu0 %v522
        %v1270 = vpop.f32.mrf.mxu0
        %v1271 = vadd.f32 0.0, %v1270
        %1272 = vmatmul.f32.gmra.mxu0 %v525
        %v1273 = vpop.f32.mrf.mxu0
        %v1274 = vadd.f32 0.0, %v1273
        %1275 = vdwg.mxu0
        %1276 = vmatpush.msra.mxu0 0.0
        %1277 = vmatpush.msra.mxu0 0.0
        %1278 = vmatpush.msra.mxu0 0.0
        %1279 = vmatpush.msra.mxu0 0.0
        %1280 = vmatpush.msra.mxu0 0.0
        %1281 = vmatpush.msra.mxu0 0.0
        %1282 = vmatpush.msra.mxu0 0.0
        %1283 = vmatpush.msra.mxu0 0.0
        %1284 = vmatpush.msra.mxu0 0.0
        %1285 = vmatpush.msra.mxu0 0.0
        %1286 = vmatpush.msra.mxu0 0.0
        %1287 = vmatpush.msra.mxu0 0.0
        %1288 = vmatpush.msra.mxu0 0.0
        %1289 = vmatpush.msra.mxu0 0.0
        %1290 = vmatpush.msra.mxu0 0.0
        %1291 = vmatpush.msra.mxu0 %v1251
        %1292 = vmatmul.f32.gmra.mxu0 %v522
        %v1293 = vpop.f32.mrf.mxu0
        %v1294 = vadd.f32 0.0, %v1293
        %1295 = vmatmul.f32.gmra.mxu0 %v525
        %v1296 = vpop.f32.mrf.mxu0
        %v1297 = vadd.f32 0.0, %v1296
        %1298 = vdwg.mxu0
        %v1299 = vmax.f32 %v1271, %v1274
        %v1300 = vrot.slane %v1299, 4
        %v1301 = vmax.f32 %v1299, %v1300
        %v1302 = vrot.slane %v1301, 2
        %v1303 = vmax.f32 %v1301, %v1302
        %v1304 = vrot.slane %v1303, 1
        %v1305 = vmax.f32 %v1303, %v1304
        %v1306 = vmax.f32 %v1294, %v1297
        %v1307 = vrot.slane %v1306, 4
        %v1308 = vmax.f32 %v1306, %v1307
        %v1309 = vrot.slane %v1308, 2
        %v1310 = vmax.f32 %v1308, %v1309
        %v1311 = vrot.slane %v1310, 1
        %v1312 = vmax.f32 %v1310, %v1311
        %v1313 = vsub.f32 %v1271, %v1305
        %v1314 = vsub.f32 %v1294, %v1312
        %v1315 = vsub.f32 %v1274, %v1305
        %v1316 = vsub.f32 %v1297, %v1312
        %v1317 = vmul.f32 %v1313, 1.442695
        %v1318 = vpow.pop %v1317
        %v1319 = vmul.f32 %v1314, 1.442695
        %v1320 = vpow.pop %v1319
        %v1321 = vmul.f32 %v1315, 1.442695
        %v1322 = vpow.pop %v1321
        %v1323 = vmul.f32 %v1316, 1.442695
        %v1324 = vpow.pop %v1323
        %v1325 = vadd.f32 %v1318, %v1322
        %v1326 = vrot.slane %v1325, 4
        %v1327 = vadd.f32 %v1325, %v1326
        %v1328 = vrot.slane %v1327, 2
        %v1329 = vadd.f32 %v1327, %v1328
        %v1330 = vrot.slane %v1329, 1
        %v1331 = vadd.f32 %v1329, %v1330
        %v1332 = vadd.f32 %v1320, %v1324
        %v1333 = vrot.slane %v1332, 4
        %v1334 = vadd.f32 %v1332, %v1333
        %v1335 = vrot.slane %v1334, 2
        %v1336 = vadd.f32 %v1334, %v1335
        %v1337 = vrot.slane %v1336, 1
        %v1338 = vadd.f32 %v1336, %v1337
        %v1339 = vrcp.pop %v1331
        %v1340 = vrcp.pop %v1338
        %v1341 = vmul.f32 %v1318, %v1339
        %v1342 = vmul.f32 %v1320, %v1340
        %v1343 = vmul.f32 %v1322, %v1339
        %v1344 = vmul.f32 %v1324, %v1340
        %v1345 = vadd.f32 %v1341, %v1342
        %1346 = vadd.xlane.f32.xlu0 %v1345
        %v1347 = vpop.xlane.xlu0 %1346
        %v1348 = vadd.f32 %v1343, %v1344
        %1349 = vadd.xlane.f32.xlu0 %v1348
        %v1350 = vpop.xlane.xlu0 %1349
        %v1351 = vadd.f32 %v1347, 1e-06
        %v1352 = vadd.f32 %v1350, 1e-06
        %v1353 = vrcp.pop %v1351
        %v1354 = vrcp.pop %v1352
        %v1355 = vmul.f32 %v1341, %v1353
        %v1356 = vmul.f32 %v1342, %v1353
        %v1357 = vmul.f32 %v1343, %v1354
        %v1358 = vmul.f32 %v1344, %v1354
        %1359 = vmatpush.xpose.msra.mxu0 0.0
        %1360 = vmatpush.xpose.msra.mxu0 0.0
        %1361 = vmatpush.xpose.msra.mxu0 0.0
        %1362 = vmatpush.xpose.msra.mxu0 0.0
        %1363 = vmatpush.xpose.msra.mxu0 0.0
        %1364 = vmatpush.xpose.msra.mxu0 0.0
        %1365 = vmatpush.xpose.msra.mxu0 0.0
        %1366 = vmatpush.xpose.msra.mxu0 0.0
        %1367 = vmatpush.xpose.msra.mxu0 0.0
        %1368 = vmatpush.xpose.msra.mxu0 0.0
        %1369 = vmatpush.xpose.msra.mxu0 0.0
        %1370 = vmatpush.xpose.msra.mxu0 0.0
        %1371 = vmatpush.xpose.msra.mxu0 0.0
        %1372 = vmatpush.xpose.msra.mxu0 0.0
        %1373 = vmatpush.xpose.msra.mxu0 %v1357
        %1374 = vmatpush.xpose.msra.mxu0 %v1355
        %1375 = vmatmul.f32.gmra.mxu0 %v1225
        %v1376 = vpop.f32.mrf.mxu0
        %v1377 = vadd.f32 0.0, %v1376
        %1378 = vdwg.mxu0
        %1379 = vmatpush.xpose.msra.mxu0 0.0
        %1380 = vmatpush.xpose.msra.mxu0 0.0
        %1381 = vmatpush.xpose.msra.mxu0 0.0
        %1382 = vmatpush.xpose.msra.mxu0 0.0
        %1383 = vmatpush.xpose.msra.mxu0 0.0
        %1384 = vmatpush.xpose.msra.mxu0 0.0
        %1385 = vmatpush.xpose.msra.mxu0 0.0
        %1386 = vmatpush.xpose.msra.mxu0 0.0
        %1387 = vmatpush.xpose.msra.mxu0 0.0
        %1388 = vmatpush.xpose.msra.mxu0 0.0
        %1389 = vmatpush.xpose.msra.mxu0 0.0
        %1390 = vmatpush.xpose.msra.mxu0 0.0
        %1391 = vmatpush.xpose.msra.mxu0 0.0
        %1392 = vmatpush.xpose.msra.mxu0 0.0
        %1393 = vmatpush.xpose.msra.mxu0 %v1358
        %1394 = vmatpush.xpose.msra.mxu0 %v1356
        %1395 = vmatmul.f32.gmra.mxu0 %v1245
        %v1396 = vpop.f32.mrf.mxu0
        %v1397 = vadd.f32 %v1377, %v1396
        %1398 = vdwg.mxu0
        %v1399 = vmul.f32 %v1397, %v1397
        %v1400 = vsel %vm680, %v1399, 0.0
        %v1401 = vrot.slane %v1400, 4
        %v1402 = vadd.f32 %v1400, %v1401
        %v1403 = vrot.slane %v1402, 2
        %v1404 = vadd.f32 %v1402, %v1403
        %v1405 = vrot.slane %v1404, 1
        %v1406 = vadd.f32 %v1404, %v1405
        %v1407 = vadd.f32 %v1406, 1e-12
        %v1408 = vrsqrt.pop %v1407
        %v1409 = vmul.f32 %v1408, %v1407
        %v1410 = vmul.f32 %v1409, %v1408
        %v1411 = vmul.f32 0.5, %v1410
        %v1412 = vsub.f32 1.5, %v1411
        %v1413 = vmul.f32 %v1408, %v1412
        %vm1414 = vweird.f32 %v1407
        %vm1415 = vweird.f32 %v1408
        %vm1416 = vmor %vm1414, %vm1415
        %v1417 = vsel %vm1416, %v1408, %v1413
        %v1418 = vmul.f32 %v1397, %v1417
        %v1420 = vsel %vm700, %v1418, 0
        %1422 = vmatpush.msra.mxu0 0.0
        %1423 = vmatpush.msra.mxu0 0.0
        %1424 = vmatpush.msra.mxu0 0.0
        %1425 = vmatpush.msra.mxu0 0.0
        %1426 = vmatpush.msra.mxu0 0.0
        %1427 = vmatpush.msra.mxu0 0.0
        %1428 = vmatpush.msra.mxu0 0.0
        %1429 = vmatpush.msra.mxu0 0.0
        %1430 = vmatpush.msra.mxu0 0.0
        %1431 = vmatpush.msra.mxu0 0.0
        %1432 = vmatpush.msra.mxu0 0.0
        %1433 = vmatpush.msra.mxu0 0.0
        %1434 = vmatpush.msra.mxu0 0.0
        %1435 = vmatpush.msra.mxu0 0.0
        %1436 = vmatpush.msra.mxu0 %v1343
        %1437 = vmatpush.msra.mxu0 %v1341
        %1438 = vmatmul.f32.gmra.mxu0 %v1420
        %v1439 = vpop.f32.mrf.mxu0
        %v1440 = vadd.f32 0.0, %v1439
        %1441 = vdwg.mxu0
        %1442 = vmatpush.msra.mxu0 0.0
        %1443 = vmatpush.msra.mxu0 0.0
        %1444 = vmatpush.msra.mxu0 0.0
        %1445 = vmatpush.msra.mxu0 0.0
        %1446 = vmatpush.msra.mxu0 0.0
        %1447 = vmatpush.msra.mxu0 0.0
        %1448 = vmatpush.msra.mxu0 0.0
        %1449 = vmatpush.msra.mxu0 0.0
        %1450 = vmatpush.msra.mxu0 0.0
        %1451 = vmatpush.msra.mxu0 0.0
        %1452 = vmatpush.msra.mxu0 0.0
        %1453 = vmatpush.msra.mxu0 0.0
        %1454 = vmatpush.msra.mxu0 0.0
        %1455 = vmatpush.msra.mxu0 0.0
        %1456 = vmatpush.msra.mxu0 %v1344
        %1457 = vmatpush.msra.mxu0 %v1342
        %1458 = vmatmul.f32.gmra.mxu0 %v1420
        %v1459 = vpop.f32.mrf.mxu0
        %v1460 = vadd.f32 0.0, %v1459
        %1461 = vdwg.mxu0
        %v1462 = vmax.f32 %v1440, 0.0
        %v1463 = vmax.f32 %v1460, 0.0
        %v1466 = vrot.slane %v1463, 4
        %v1467 = vsel %vm476, %v1462, %v1466
        %1469 = vst [vmem:[#allocation2] sm:$0xff] %v1467
        %v1470 = vld [vmem:[#allocation2] sm:$0xff]
        %1472 = vst [vmem:[#allocation1] ss:$2 sm:$0xff] %v1470
        %v1473 = vld.sshfl [vmem:[#allocation1] sm:$0xff pattern:$0x75316420]
        %v1474 = vld.sshfl [vmem:[#allocation1 + $0x8] sm:$0xff pattern:$0x75316420]
        %v1475 = vsel %vm476, %v1473, 0
        %v1477 = vsel %vm476, %v1474, 0
        %1479 = vmatpush.msra.mxu0 0.0
        %1480 = vmatpush.msra.mxu0 0.0
        %1481 = vmatpush.msra.mxu0 0.0
        %1482 = vmatpush.msra.mxu0 0.0
        %1483 = vmatpush.msra.mxu0 0.0
        %1484 = vmatpush.msra.mxu0 0.0
        %1485 = vmatpush.msra.mxu0 0.0
        %1486 = vmatpush.msra.mxu0 0.0
        %1487 = vmatpush.msra.mxu0 0.0
        %1488 = vmatpush.msra.mxu0 0.0
        %1489 = vmatpush.msra.mxu0 0.0
        %1490 = vmatpush.msra.mxu0 0.0
        %1491 = vmatpush.msra.mxu0 0.0
        %1492 = vmatpush.msra.mxu0 0.0
        %1493 = vmatpush.msra.mxu0 0.0
        %1494 = vmatpush.msra.mxu0 %v1475
        %1495 = vmatmul.f32.gmra.mxu0 %v758
        %v1496 = vpop.f32.mrf.mxu0
        %v1497 = vadd.f32 %v415, %v1496
        %1498 = vdwg.mxu0
        %1499 = vmatpush.msra.mxu0 0.0
        %1500 = vmatpush.msra.mxu0 0.0
        %1501 = vmatpush.msra.mxu0 0.0
        %1502 = vmatpush.msra.mxu0 0.0
        %1503 = vmatpush.msra.mxu0 0.0
        %1504 = vmatpush.msra.mxu0 0.0
        %1505 = vmatpush.msra.mxu0 0.0
        %1506 = vmatpush.msra.mxu0 0.0
        %1507 = vmatpush.msra.mxu0 0.0
        %1508 = vmatpush.msra.mxu0 0.0
        %1509 = vmatpush.msra.mxu0 0.0
        %1510 = vmatpush.msra.mxu0 0.0
        %1511 = vmatpush.msra.mxu0 0.0
        %1512 = vmatpush.msra.mxu0 0.0
        %1513 = vmatpush.msra.mxu0 0.0
        %1514 = vmatpush.msra.mxu0 %v1477
        %1515 = vmatmul.f32.gmra.mxu0 %v758
        %v1516 = vpop.f32.mrf.mxu0
        %v1517 = vadd.f32 %v415, %v1516
        %1518 = vdwg.mxu0
        %v1519 = vadd.f32 %v1497, %v1199
        %v1520 = vadd.f32 %v1517, %v1200
        %v1521 = vmax.f32 %v1519, 0.0
        %v1522 = vmax.f32 %v1520, 0.0
        %v1525 = vrot.slane %v1522, 4
        %v1526 = vsel %vm476, %v1521, %v1525
        %1528 = vst [vmem:[%s380] sm:$0xff] %v1526
        %s1529 = sand.u32 %s269, 1
        %s1530 = scalar_lea.sflag [#allocation5], %s1529
        %s1531 = sand.u32 %s269, 1
        %s1532 = smul.addr %s1531, 8
        %s1533 = scalar_lea.vmem [#allocation4], %s1532
        // Predicated region
        $region65: #{tpu_custom_call.1} parent=63 // pred_check
          %p1534 = pneg %p279
        $region66: #{tpu_custom_call.1} parent=63 // pred_check_branch
          %1536 = sbr.rel (%p1534) target = $region68
        $region67: #{tpu_custom_call.1} parent=63 // pred_region
          %s1537 = smul.u32 2, %s25
          %1539 = vsyncadd %s1530, 0
          %s1540 = smul.addr %s1537, 4
          %s1541 = scalar_lea.hbm %s11, %s1540
          %s1543 = sshll.u32 %s1533, 4
          %s1544 = int_to_ptr.vmem [resolvable:$true] %s1543
          %s1545 = sshll.u32 %s1541, 4
          %s1546 = int_to_ptr.hbm [resolvable:$true] %s1545
          %1548 = dma.vmem_to_hbm [thread:$0]  %s1544, 128, %s1546, %s1530
        $region68: #{tpu_custom_call.1} parent=63 // pred_fallthru
          _
      $region64: #{tpu_custom_call.1} parent=5 // pred_fallthru
        _
      %p1549 = scmp.le.s32.totalorder 2, %s20
      // Predicated region
      $region69: #{tpu_custom_call.1} parent=5 // pred_check
        %p1550 = pneg %p1549
      $region70: #{tpu_custom_call.1} parent=5 // pred_check_branch
        %1552 = sbr.rel (%p1550) target = $region72
      $region71: #{tpu_custom_call.1} parent=5 // pred_region
        %s1553 = ssub.s32 %s20, 2
        // Predicated region
        $region73: #{tpu_custom_call.1} parent=71 // pred_check
          %p1554 = pneg %p285
        $region74: #{tpu_custom_call.1} parent=71 // pred_check_branch
          %1556 = sbr.rel (%p1554) target = $region76
        $region75: #{tpu_custom_call.1} parent=71 // pred_region
          %s1557 = sand.u32 %s270, 1
          %s1558 = scalar_lea.sflag [#allocation5], %s1557
          %s1559 = sand.u32 %s270, 1
          %s1560 = smul.addr %s1559, 8
          %s1561 = scalar_lea.vmem [#allocation4], %s1560
          %1563 = dma.done %s1558, 128
        $region76: #{tpu_custom_call.1} parent=71 // pred_fallthru
          _
      $region72: #{tpu_custom_call.1} parent=5 // pred_fallthru
        _
    $region6: #{tpu_custom_call.1} parent=1 // loop_footer
      %s24 = sadd.s32 1, %s20
    $region7: #{tpu_custom_call.1} parent=1 // loop_footer_branch
      %19 = sbr.rel target = $region3
    $region8: #{tpu_custom_call.1} parent=1 // loop_exit
      _
    %1564 = vsyncpa [#allocation5], 1
    %s1565 = scalar_lea.sflag [#allocation5], 1
    %1566 = vsyncpa %s1565, 1

</llo_original>
